<compile_context>
chip_gen: v5e
topology: v5e:2x2
jax: 0.10.0
libtpu: 0.0.40
codegen_flags: <defaults>
</compile_context>

<pallas_src>
import functools

import jax
import jax.numpy as jnp
from jax.experimental import pallas as pl
from jax.experimental.pallas import tpu as pltpu


def _ceil_to(x, m):
  return -(-x // m) * m


def _padded_bytes(shape, dtype):
  """Honest VMEM footprint: last dim padded to 128 lanes, second-minor padded to the
  dtype's sublane tile (8 for 4-byte, 16 for 2-byte, 32 for 1-byte)."""
  itemsize = jnp.dtype(dtype).itemsize
  sublane = {4: 8, 2: 16, 1: 32}.get(itemsize, 8)
  dims = list(shape)
  if len(dims) >= 1:
    dims[-1] = _ceil_to(dims[-1], 128)
  if len(dims) >= 2:
    dims[-2] = _ceil_to(dims[-2], sublane)
  total = 1
  for d in dims:
    total *= d
  return total * itemsize


def _vmem_capacity_bytes():
  try:
    return int(pltpu.get_tpu_info().vmem_capacity_bytes)
  except Exception:
    return 64 * 1024 * 1024   # conservative v7x-sized fallback


# ---------------------------------------------------------------------------
# Phase 1: per-image in-kernel im2col + one MXU matmul + BN statistics
# ---------------------------------------------------------------------------
def _conv_stats_kernel(xp_ref, w_ref, conv_ref, stats_ref, *, hout, wout, stride):
  """xp_ref:    (1, H+2, W+2, Cin)   bf16  zero-padded NHWC image
     w_ref:     (9*Cin, Cout)        bf16  (kh, kw, cin)-major filter matrix
     conv_ref:  (1, Cout, Hout*Wout) bf16  channel-major conv slab (this image)
     stats_ref: (1, 2, Cout)         f32   per-core resident [sum; sum of squares]."""
  i = pl.program_id(1)            # position along the "arbitrary" accumulation axis

  x = xp_ref[...]                 # (1, H+2, W+2, Cin)
  taps = []
  for kh in range(3):
    for kw in range(3):
      # Static slices; for stride > 1 these become strided slices.
      taps.append(x[:, kh:kh + (hout - 1) * stride + 1:stride,
                       kw:kw + (wout - 1) * stride + 1:stride, :])
  patches = jnp.concatenate(taps, axis=-1)              # (1, Hout, Wout, 9*Cin)
  patches = patches.reshape(hout * wout, patches.shape[-1])

  # Single MXU matmul, bf16 operands, f32 accumulation.
  acc = jnp.dot(patches, w_ref[...], preferred_element_type=jnp.float32)  # (HW, Cout)

  # Channel-major bf16 slab via a 2-D XLU transpose, so the final NCHW output is a
  # free reshape in the wrapper (no standalone transpose pass over the activations).
  conv_ref[...] = jnp.transpose(acc)[None].astype(conv_ref.dtype)

  # One-pass BN statistics from the f32 accumulator.
  # TODO(synk): E[x^2]-mean^2 can cancel when |mean| >> std; a Welford/shifted
  # accumulation would be more robust at the cost of extra resident state.
  psum = jnp.sum(acc, axis=0, keepdims=True)             # (1, Cout)
  psq = jnp.sum(acc * acc, axis=0, keepdims=True)        # (1, Cout)
  part = jnp.concatenate([psum, psq], axis=0)[None]      # (1, 2, Cout)

  @pl.when(i == 0)
  def _init():
    stats_ref[...] = jnp.zeros_like(stats_ref)

  stats_ref[...] += part


# ---------------------------------------------------------------------------
# Phase 2: fused BN scale/shift (single FMA) + LeakyReLU, channel-major layout
# ---------------------------------------------------------------------------
def _bn_lrelu_kernel(conv_ref, sst_ref, o_ref, *, neg_slope):
  """conv_ref: (NB, Cout, HW) bf16, sst_ref: (2, Cout, 1) f32 [scale; shift]."""
  y = conv_ref[...].astype(jnp.float32) * sst_ref[0:1] + sst_ref[1:2]
  o_ref[...] = jnp.where(y > 0, y, neg_slope * y).astype(o_ref.dtype)


def _pick_batch_block(n_imgs, cout, hw, budget):
  """Images per phase-2 tile: divides n_imgs, honest padded block bytes within budget,
  preferring >= 2 grid steps so the pipeline actually double-buffers."""
  largest_fitting = None
  for nb in range(n_imgs, 0, -1):
    if n_imgs % nb:
      continue
    blk = (_padded_bytes((nb, cout, hw), jnp.bfloat16) +     # slab in
           _padded_bytes((nb, cout, hw), jnp.float32))       # activations out
    if blk > budget:
      continue
    if largest_fitting is None:
      largest_fitting = nb
    if n_imgs // nb >= 2:
      return nb
  # nb=1 always divides; it only exceeds the budget if a single image is enormous.
  return largest_fitting if largest_fitting is not None else 1


@functools.partial(jax.jit, static_argnames=("stride", "eps", "neg_slope"))
def conv_bn_lrelu(x_nchw, w_oihw, b_conv, gamma, beta,
                  stride=1, eps=1e-5, neg_slope=0.01):
  """Forward pass of ConvBNReLU (training-mode BatchNorm).  NCHW in / NCHW out."""
  # Conv bias cancels exactly under training-mode BN; kept for nn.Conv2d API parity.
  del b_conv

  n, cin, h, w = x_nchw.shape
  cout = w_oihw.shape[0]
  hout = (h + 2 - 3) // stride + 1
  wout = (w + 2 - 3) // stride + 1
  hw = hout * wout
  rows = n * hw                      # real elements per channel for BN stats
  k = 9 * cin

  # ---- device-aware budgets ------------------------------------------------
  vmem_cap = _vmem_capacity_bytes()
  blk_budget = max(4 * 1024 * 1024, vmem_cap // 16)   # bigger tiles on 128 MiB parts

  # ---- grid sizing: one image per phase-1 step, leading "parallel" core axis -
  nc = 2 if n >= 2 else 1            # splits across v7x's 2 TCs; harmless elsewhere
  tiles_per_core = -(-n // nc)
  n_pad = nc * tiles_per_core        # zero-padded images contribute 0 to both stats

  # ---- wrapper-side input plumbing (one fused XLA pass: transpose+pad+cast) --
  x_nhwc = jnp.transpose(x_nchw, (0, 2, 3, 1)).astype(jnp.bfloat16)
  xp = jnp.pad(x_nhwc, ((0, n_pad - n), (1, 1), (1, 1), (0, 0)))
  w_mat = jnp.transpose(w_oihw, (2, 3, 1, 0)).reshape(k, cout).astype(jnp.bfloat16)

  # ---- honest VMEM estimate for phase 1 -> vmem_limit_bytes ------------------
  est = 2 * (_padded_bytes((1, h + 2, w + 2, cin), jnp.bfloat16) +   # input blocks
             _padded_bytes((k, cout), jnp.bfloat16) +                # weights
             _padded_bytes((1, cout, hw), jnp.bfloat16) +            # slab block
             _padded_bytes((1, 2, cout), jnp.float32))               # stats block
  est += (_padded_bytes((1, hout, wout, k), jnp.bfloat16) +          # concat taps
          _padded_bytes((hw, k), jnp.bfloat16) +                     # patch matrix
          2 * _padded_bytes((hw, cout), jnp.float32))                # acc + transpose
  vmem_limit = int(min(max(2 * est, 32 * 1024 * 1024), (3 * vmem_cap) // 4))

  # ---- phase 1: conv + stats -------------------------------------------------
  conv3d, stats = pl.pallas_call(
      functools.partial(_conv_stats_kernel, hout=hout, wout=wout, stride=stride),
      out_shape=(jax.ShapeDtypeStruct((n_pad, cout, hw), jnp.bfloat16),
                 jax.ShapeDtypeStruct((nc, 2, cout), jnp.float32)),
      grid=(nc, tiles_per_core),
      in_specs=[
          pl.BlockSpec((1, h + 2, w + 2, cin),
                       lambda c, i: (c * tiles_per_core + i, 0, 0, 0)),
          # TODO(synk): for very large Cin*Cout this invariant weight block could be
          # single-buffered (pipeline_mode=pl.Buffered(1)) to free VMEM for streaming.
          pl.BlockSpec((k, cout), lambda c, i: (0, 0)),
      ],
      out_specs=(
          pl.BlockSpec((1, cout, hw),
                       lambda c, i: (c * tiles_per_core + i, 0, 0)),
          pl.BlockSpec((1, 2, cout), lambda c, i: (c, 0, 0)),   # per-core resident
      ),
      compiler_params=pltpu.CompilerParams(
          dimension_semantics=("parallel", "arbitrary"),
          vmem_limit_bytes=vmem_limit),
  )(xp, w_mat)

  # ---- fold BN into one per-channel scale/shift (tiny (Cout,) math in XLA) ----
  tot = jnp.sum(stats, axis=0)                           # combine per-core partials
  mean = tot[0] / rows
  var = jnp.maximum(tot[1] / rows - mean * mean, 0.0)    # biased variance (training BN)
  scale = gamma.astype(jnp.float32) * jax.lax.rsqrt(var + eps)
  shift = beta.astype(jnp.float32) - mean * scale
  sst = jnp.stack([scale, shift], axis=0)[:, :, None]    # (2, Cout, 1)

  # ---- phase 2: scale/shift + LeakyReLU ("parallel" -> 2 TCs on v7x) ----------
  nb = _pick_batch_block(n_pad, cout, hw, blk_budget)
  out3d = pl.pallas_call(
      functools.partial(_bn_lrelu_kernel, neg_slope=neg_slope),
      out_shape=jax.ShapeDtypeStruct((n_pad, cout, hw), x_nchw.dtype),
      grid=(n_pad // nb,),
      in_specs=[
          pl.BlockSpec((nb, cout, hw), lambda i: (i, 0, 0)),
          pl.BlockSpec((2, cout, 1), lambda i: (0, 0, 0)),
      ],
      out_specs=pl.BlockSpec((nb, cout, hw), lambda i: (i, 0, 0)),
      compiler_params=pltpu.CompilerParams(
          dimension_semantics=("parallel",),
          vmem_limit_bytes=vmem_limit),
  )(conv3d, sst)

  # Channel-major slab -> NCHW is a free reshape (no transpose pass over activations).
  return out3d[:n].reshape(n, cout, hout, wout)


def _reference(x_nchw, w_oihw, b_conv, gamma, beta,
               stride=1, eps=1e-5, neg_slope=0.01):
  """Pure-JAX reference (f32, includes the conv bias) for a sanity check."""
  x = jnp.transpose(x_nchw, (0, 2, 3, 1))
  wgt = jnp.transpose(w_oihw, (2, 3, 1, 0))
  y = jax.lax.conv_general_dilated(
      x, wgt, window_strides=(stride, stride), padding=[(1, 1), (1, 1)],
      dimension_numbers=("NHWC", "HWIO", "NHWC"))
  y = y + b_conv
  mean = jnp.mean(y, axis=(0, 1, 2), keepdims=True)
  var = jnp.mean((y - mean) ** 2, axis=(0, 1, 2), keepdims=True)
  y = (y - mean) * jax.lax.rsqrt(var + eps) * gamma + beta
  y = jnp.where(y > 0, y, neg_slope * y)
  return jnp.transpose(y, (0, 3, 1, 2))


if __name__ == "__main__":
  nin, nout, stride = 4, 8, 1
  key = jax.random.PRNGKey(0)
  kx, kw, kb, kg, kbeta = jax.random.split(key, 5)

  # Deterministic synthetic parameters (shapes per nn.Conv2d / nn.BatchNorm2d).
  x = jax.random.normal(kx, (2, nin, 16, 16), jnp.float32)
  w = jax.random.normal(kw, (nout, nin, 3, 3), jnp.float32) * 0.1
  b_conv = jax.random.normal(kb, (nout,), jnp.float32) * 0.1
  gamma = 1.0 + 0.1 * jax.random.normal(kg, (nout,), jnp.float32)
  beta = 0.1 * jax.random.normal(kbeta, (nout,), jnp.float32)

  out = conv_bn_lrelu(x, w, b_conv, gamma, beta, stride=stride)
  out = jax.block_until_ready(out)

  ref = jax.block_until_ready(_reference(x, w, b_conv, gamma, beta, stride=stride))
  assert out.shape == (2, nout, 16, 16)
  assert bool(jnp.all(jnp.isfinite(out)))
  # bf16 MXU operands -> ~1e-3 level differences; well inside this tolerance.
  assert float(jnp.max(jnp.abs(out - ref))) < 5e-2

  print("KERNEL_OK")
</pallas_src>

<mosaic_0001>
module attributes {stable_mosaic.version = 11 : i64} {
  func.func @_conv_stats_kernel(%arg0: i32, %arg1: i32, %arg2: memref<1x18x18x4xbf16, #tpu.memory_space<vmem>>, %arg3: memref<36x8xbf16, #tpu.memory_space<vmem>>, %arg4: memref<1x8x256xbf16, #tpu.memory_space<vmem>>, %arg5: memref<1x2x8xf32, #tpu.memory_space<vmem>>) attributes {dimension_semantics = [#tpu.dimension_semantics<parallel>, #tpu.dimension_semantics<arbitrary>], iteration_bounds = array<i64: 2, 1>, scalar_prefetch = 0 : i64, scratch_operands = 0 : i64, tpu.core_type = #tpu.core_type<tc>, window_params = [{transform_indices = @transform_0, window_bounds = array<i64: 1, 18, 18, 4>}, {pipeline_mode = #tpu.pipeline_mode<synchronous>, transform_indices = @transform_1, window_bounds = array<i64: 36, 8>}, {transform_indices = @transform_2, window_bounds = array<i64: 1, 8, 256>}, {transform_indices = @transform_3, window_bounds = array<i64: 1, 2, 8>}]} {
    %c0 = arith.constant 0 : index
    %c0_0 = arith.constant 0 : index
    %c0_1 = arith.constant 0 : index
    %c0_2 = arith.constant 0 : index
    %0 = vector.load %arg2[%c0, %c0_0, %c0_1, %c0_2] : memref<1x18x18x4xbf16, #tpu.memory_space<vmem>>, vector<1x18x18x4xbf16>
    %1 = vector.extract_strided_slice %0 {offsets = [0, 0, 0, 0], sizes = [1, 16, 16, 4], strides = [1, 1, 1, 1]} : vector<1x18x18x4xbf16> to vector<1x16x16x4xbf16>
    %2 = vector.extract_strided_slice %0 {offsets = [0, 0, 1, 0], sizes = [1, 16, 16, 4], strides = [1, 1, 1, 1]} : vector<1x18x18x4xbf16> to vector<1x16x16x4xbf16>
    %3 = vector.extract_strided_slice %0 {offsets = [0, 0, 2, 0], sizes = [1, 16, 16, 4], strides = [1, 1, 1, 1]} : vector<1x18x18x4xbf16> to vector<1x16x16x4xbf16>
    %4 = vector.extract_strided_slice %0 {offsets = [0, 1, 0, 0], sizes = [1, 16, 16, 4], strides = [1, 1, 1, 1]} : vector<1x18x18x4xbf16> to vector<1x16x16x4xbf16>
    %5 = vector.extract_strided_slice %0 {offsets = [0, 1, 1, 0], sizes = [1, 16, 16, 4], strides = [1, 1, 1, 1]} : vector<1x18x18x4xbf16> to vector<1x16x16x4xbf16>
    %6 = vector.extract_strided_slice %0 {offsets = [0, 1, 2, 0], sizes = [1, 16, 16, 4], strides = [1, 1, 1, 1]} : vector<1x18x18x4xbf16> to vector<1x16x16x4xbf16>
    %7 = vector.extract_strided_slice %0 {offsets = [0, 2, 0, 0], sizes = [1, 16, 16, 4], strides = [1, 1, 1, 1]} : vector<1x18x18x4xbf16> to vector<1x16x16x4xbf16>
    %8 = vector.extract_strided_slice %0 {offsets = [0, 2, 1, 0], sizes = [1, 16, 16, 4], strides = [1, 1, 1, 1]} : vector<1x18x18x4xbf16> to vector<1x16x16x4xbf16>
    %9 = vector.extract_strided_slice %0 {offsets = [0, 2, 2, 0], sizes = [1, 16, 16, 4], strides = [1, 1, 1, 1]} : vector<1x18x18x4xbf16> to vector<1x16x16x4xbf16>
    %10 = tpu.concatenate %1, %2, %3, %4, %5, %6, %7, %8, %9 in 3 : vector<1x16x16x4xbf16>, vector<1x16x16x4xbf16>, vector<1x16x16x4xbf16>, vector<1x16x16x4xbf16>, vector<1x16x16x4xbf16>, vector<1x16x16x4xbf16>, vector<1x16x16x4xbf16>, vector<1x16x16x4xbf16>, vector<1x16x16x4xbf16> -> vector<1x16x16x36xbf16>
    %11 = vector.shape_cast %10 : vector<1x16x16x36xbf16> to vector<256x36xbf16>
    %c0_3 = arith.constant 0 : index
    %c0_4 = arith.constant 0 : index
    %12 = vector.load %arg3[%c0_3, %c0_4] : memref<36x8xbf16, #tpu.memory_space<vmem>>, vector<36x8xbf16>
    %cst = arith.constant dense<0.000000e+00> : vector<256x8xf32>
    %13 = tpu.matmul %11, %12, %cst {dimension_numbers = #tpu.dot_dimension_numbers<[1], [0], [0], [1], [0, 0, 1, 1], [], []>} : vector<256x36xbf16>, vector<36x8xbf16>, vector<256x8xf32> -> vector<256x8xf32>
    %14 = tpu.transpose %13, [1, 0] : vector<256x8xf32> -> vector<8x256xf32>
    %15 = vector.shape_cast %14 : vector<8x256xf32> to vector<1x8x256xf32>
    %16 = arith.truncf %15 : vector<1x8x256xf32> to vector<1x8x256xbf16>
    %c0_5 = arith.constant 0 : index
    %c0_6 = arith.constant 0 : index
    %c0_7 = arith.constant 0 : index
    %17 = vector.load %arg4[%c0_5, %c0_6, %c0_7] : memref<1x8x256xbf16, #tpu.memory_space<vmem>>, vector<1x8x256xbf16>
    tpu.vector_store %arg4[%c0_5, %c0_6, %c0_7], %16 {strides = array<i32>} : memref<1x8x256xbf16, #tpu.memory_space<vmem>>, vector<1x8x256xbf16>,
    %cst_8 = arith.constant dense<0.000000e+00> : vector<8xf32>
    %18 = vector.multi_reduction <add>, %13, %cst_8 [0] : vector<256x8xf32> to vector<8xf32>
    %19 = vector.shape_cast %18 : vector<8xf32> to vector<1x8xf32>
    %20 = arith.mulf %13, %13 : vector<256x8xf32>
    %cst_9 = arith.constant dense<0.000000e+00> : vector<8xf32>
    %21 = vector.multi_reduction <add>, %20, %cst_9 [0] : vector<256x8xf32> to vector<8xf32>
    %22 = vector.shape_cast %21 : vector<8xf32> to vector<1x8xf32>
    %23 = tpu.concatenate %19, %22 in 0 : vector<1x8xf32>, vector<1x8xf32> -> vector<2x8xf32>
    %24 = vector.shape_cast %23 : vector<2x8xf32> to vector<1x2x8xf32>
    %c0_i32 = arith.constant 0 : i32
    %25 = arith.cmpi eq, %arg1, %c0_i32 : i32
    %26 = arith.extui %25 : i1 to i32
    %c0_i32_10 = arith.constant 0 : i32
    %27 = arith.cmpi ne, %26, %c0_i32_10 : i32
    scf.if %27 {
      %cst_17 = arith.constant 0.000000e+00 : f32
      %31 = vector.broadcast %cst_17 : f32 to vector<1x2x8xf32>
      %c0_18 = arith.constant 0 : index
      %c0_19 = arith.constant 0 : index
      %c0_20 = arith.constant 0 : index
      %32 = vector.load %arg5[%c0_18, %c0_19, %c0_20] : memref<1x2x8xf32, #tpu.memory_space<vmem>>, vector<1x2x8xf32>
      tpu.vector_store %arg5[%c0_18, %c0_19, %c0_20], %31 {strides = array<i32>} : memref<1x2x8xf32, #tpu.memory_space<vmem>>, vector<1x2x8xf32>,
    } else {
    }
    %c0_11 = arith.constant 0 : index
    %c0_12 = arith.constant 0 : index
    %c0_13 = arith.constant 0 : index
    %28 = vector.load %arg5[%c0_11, %c0_12, %c0_13] : memref<1x2x8xf32, #tpu.memory_space<vmem>>, vector<1x2x8xf32>
    %29 = arith.addf %28, %24 : vector<1x2x8xf32>
    %c0_14 = arith.constant 0 : index
    %c0_15 = arith.constant 0 : index
    %c0_16 = arith.constant 0 : index
    %30 = vector.load %arg5[%c0_14, %c0_15, %c0_16] : memref<1x2x8xf32, #tpu.memory_space<vmem>>, vector<1x2x8xf32>
    tpu.vector_store %arg5[%c0_14, %c0_15, %c0_16], %29 {strides = array<i32>} : memref<1x2x8xf32, #tpu.memory_space<vmem>>, vector<1x2x8xf32>,
    return
  }
  func.func @transform_0(%arg0: i32, %arg1: i32) -> (i32, i32, i32, i32) {
    %c1_i32 = arith.constant 1 : i32
    %0 = arith.muli %arg0, %c1_i32 : i32
    %1 = arith.addi %0, %arg1 : i32
    %c0_i32 = arith.constant 0 : i32
    %c0_i32_0 = arith.constant 0 : i32
    %c0_i32_1 = arith.constant 0 : i32
    %c0_i32_2 = arith.constant 0 : i32
    return %1, %c0_i32, %c0_i32_0, %c0_i32_1 : i32, i32, i32, i32
  }
  func.func @transform_1(%arg0: i32, %arg1: i32) -> (i32, i32) {
    %c0_i32 = arith.constant 0 : i32
    %c0_i32_0 = arith.constant 0 : i32
    %c0_i32_1 = arith.constant 0 : i32
    return %c0_i32, %c0_i32_0 : i32, i32
  }
  func.func @transform_2(%arg0: i32, %arg1: i32) -> (i32, i32, i32) {
    %c1_i32 = arith.constant 1 : i32
    %0 = arith.muli %arg0, %c1_i32 : i32
    %1 = arith.addi %0, %arg1 : i32
    %c0_i32 = arith.constant 0 : i32
    %c0_i32_0 = arith.constant 0 : i32
    %c0_i32_1 = arith.constant 0 : i32
    return %1, %c0_i32, %c0_i32_0 : i32, i32, i32
  }
  func.func @transform_3(%arg0: i32, %arg1: i32) -> (i32, i32, i32) {
    %c0_i32 = arith.constant 0 : i32
    %c0_i32_0 = arith.constant 0 : i32
    %c0_i32_1 = arith.constant 0 : i32
    return %arg0, %c0_i32, %c0_i32_0 : i32, i32, i32
  }
}

module attributes {stable_mosaic.version = 11 : i64} {
  func.func @_bn_lrelu_kernel(%arg0: i32, %arg1: memref<1x8x256xbf16, #tpu.memory_space<vmem>>, %arg2: memref<2x8x1xf32, #tpu.memory_space<vmem>>, %arg3: memref<1x8x256xf32, #tpu.memory_space<vmem>>) attributes {dimension_semantics = [#tpu.dimension_semantics<parallel>], iteration_bounds = array<i64: 2>, scalar_prefetch = 0 : i64, scratch_operands = 0 : i64, tpu.core_type = #tpu.core_type<tc>, window_params = [{transform_indices = @transform_0, window_bounds = array<i64: 1, 8, 256>}, {pipeline_mode = #tpu.pipeline_mode<synchronous>, transform_indices = @transform_1, window_bounds = array<i64: 2, 8, 1>}, {transform_indices = @transform_2, window_bounds = array<i64: 1, 8, 256>}]} {
    %c0 = arith.constant 0 : index
    %c0_0 = arith.constant 0 : index
    %c0_1 = arith.constant 0 : index
    %0 = vector.load %arg1[%c0, %c0_0, %c0_1] : memref<1x8x256xbf16, #tpu.memory_space<vmem>>, vector<1x8x256xbf16>
    %1 = arith.extf %0 : vector<1x8x256xbf16> to vector<1x8x256xf32>
    %c0_2 = arith.constant 0 : index
    %c0_3 = arith.constant 0 : index
    %c0_4 = arith.constant 0 : index
    %2 = vector.load %arg2[%c0_2, %c0_3, %c0_4] : memref<2x8x1xf32, #tpu.memory_space<vmem>>, vector<1x8x1xf32>
    %3 = vector.broadcast %2 : vector<1x8x1xf32> to vector<1x8x256xf32>
    %4 = arith.mulf %1, %3 : vector<1x8x256xf32>
    %c1 = arith.constant 1 : index
    %c0_5 = arith.constant 0 : index
    %c0_6 = arith.constant 0 : index
    %5 = vector.load %arg2[%c1, %c0_5, %c0_6] : memref<2x8x1xf32, #tpu.memory_space<vmem>>, vector<1x8x1xf32>
    %6 = vector.broadcast %5 : vector<1x8x1xf32> to vector<1x8x256xf32>
    %7 = arith.addf %4, %6 : vector<1x8x256xf32>
    %cst = arith.constant 0.000000e+00 : f32
    %8 = vector.broadcast %cst : f32 to vector<1x8x256xf32>
    %9 = arith.cmpf ogt, %7, %8 : vector<1x8x256xf32>
    %cst_7 = arith.constant 0.00999999977 : f32
    %10 = vector.broadcast %cst_7 : f32 to vector<1x8x256xf32>
    %11 = arith.mulf %10, %7 : vector<1x8x256xf32>
    %12 = arith.select %9, %7, %11 : vector<1x8x256xi1>, vector<1x8x256xf32>
    %c0_8 = arith.constant 0 : index
    %c0_9 = arith.constant 0 : index
    %c0_10 = arith.constant 0 : index
    %13 = vector.load %arg3[%c0_8, %c0_9, %c0_10] : memref<1x8x256xf32, #tpu.memory_space<vmem>>, vector<1x8x256xf32>
    tpu.vector_store %arg3[%c0_8, %c0_9, %c0_10], %12 {strides = array<i32>} : memref<1x8x256xf32, #tpu.memory_space<vmem>>, vector<1x8x256xf32>,
    return
  }
  func.func @transform_0(%arg0: i32) -> (i32, i32, i32) {
    %c0_i32 = arith.constant 0 : i32
    %c0_i32_0 = arith.constant 0 : i32
    %c0_i32_1 = arith.constant 0 : i32
    return %arg0, %c0_i32, %c0_i32_0 : i32, i32, i32
  }
  func.func @transform_1(%arg0: i32) -> (i32, i32, i32) {
    %c0_i32 = arith.constant 0 : i32
    %c0_i32_0 = arith.constant 0 : i32
    %c0_i32_1 = arith.constant 0 : i32
    %c0_i32_2 = arith.constant 0 : i32
    return %c0_i32, %c0_i32_0, %c0_i32_1 : i32, i32, i32
  }
  func.func @transform_2(%arg0: i32) -> (i32, i32, i32) {
    %c0_i32 = arith.constant 0 : i32
    %c0_i32_0 = arith.constant 0 : i32
    %c0_i32_1 = arith.constant 0 : i32
    return %arg0, %c0_i32, %c0_i32_0 : i32, i32, i32
  }
}

</mosaic_0001>

<llo_original>
// kernel: conv_bn_lrelu.3
$region0: #{conv_bn_lrelu.3}
  #allocation0 [shape = 'u32[]', space=smem, size = 0x4, offset = 0x4, fixed_abs, tag = 'smem constant byte address 0x4 - core index']
  #allocation1 [shape = 'u32[72,128]{1,0:T(1,128)}', space=vmem, size = 0x9000, scoped, tag = 'internal scratch']
  %s0 = inlined_call_operand.vmem [shape: bf16[2,8,256], index: 0, kind: input, shape index: {}]
  %s1 = inlined_call_operand.vmem [shape: f32[2,8,1], index: 1, kind: input, shape index: {}]
  %s2 = inlined_call_operand.vmem [shape: f32[2,8,256], index: 2, kind: output, shape index: {}]
  %s3 = sld [smem:[#allocation0]]
  $region41: #{conv_bn_lrelu.3} parent=0
    _
  %s5 = ssub.s32 1, %s3
  %s6 = scalar_select 0, %s5, %s3
  loop: start=0, step=1, limit=4
  $region2: #{conv_bn_lrelu.3} parent=0 // loop_pre_header
    _
  $region3: #{conv_bn_lrelu.3} parent=0 // loop_header
    %s8 = sphi 0, %s12
    %p9 = scmp.ge.s32.totalorder %s8, 4
    %s18 = sphi 0, %s20
    %s21 = sphi 0, %s18
    %s22 = sphi 0, %s21
    %s38 = sphi 0, %s22
    %s42 = sphi 0, %s42
    %s44 = sphi 0, %s42
    %s45 = sphi 0, %s44
    %s59 = sphi 0, %s45
    %s65 = sphi 0, %s67
    %s68 = sphi 0, %s65
    %s69 = sphi 0, %s68
    %s85 = sphi 0, %s69
  $region4: #{conv_bn_lrelu.3} parent=0 // loop_header_branch
    %11 = sbr.rel (%p9) target = $region8
  $region5: #{conv_bn_lrelu.3} parent=0 // loop_body
    %s13 = ssub.s32 %s8, 1
    %s14 = ssub.s32 %s8, 2
    %s15 = sadd.s32 %s8, 1
    %s16 = ssub.s32 %s8, %s15
    %p17 = scmp.eq.s32.totalorder %s16, 0
    %s19 = sadd.s32 %s18, 1
    %s20 = scalar_select %p17, %s18, %s19
    %p23 = pneg %p17
    %p24 = scmp.eq.s32.totalorder %s8, 1
    %p25 = por %p23, %p24
    %p26 = scmp.ne.s32.totalorder %s18, %s21
    %p27 = scmp.eq.s32.totalorder %s8, 0
    %p28 = por %p26, %p27
    %p29 = scmp.ne.s32.totalorder %s18, %s21
    %p30 = scmp.eq.s32.totalorder %s13, 1
    %p31 = por %p29, %p30
    %p32 = scmp.ne.s32.totalorder %s21, %s22
    %p33 = scmp.eq.s32.totalorder %s13, 0
    %p34 = por %p32, %p33
    %p35 = scmp.ne.s32.totalorder %s21, %s22
    %p36 = scmp.eq.s32.totalorder %s14, 1
    %p37 = por %p35, %p36
    %p39 = scmp.ne.s32.totalorder %s22, %s38
    %p40 = scmp.eq.s32.totalorder %s14, 0
    %p41 = por %p39, %p40
    %s43 = sadd.s32 %s42, 1
    %p46 = scmp.eq.s32.totalorder %s8, 1
    %p47 = scmp.ne.s32.totalorder %s42, %s44
    %p48 = scmp.eq.s32.totalorder %s8, 0
    %p49 = por %p47, %p48
    %p50 = scmp.ne.s32.totalorder %s42, %s44
    %p51 = scmp.eq.s32.totalorder %s13, 1
    %p52 = por %p50, %p51
    %p53 = scmp.ne.s32.totalorder %s44, %s45
    %p54 = scmp.eq.s32.totalorder %s13, 0
    %p55 = por %p53, %p54
    %p56 = scmp.ne.s32.totalorder %s44, %s45
    %p57 = scmp.eq.s32.totalorder %s14, 1
    %p58 = por %p56, %p57
    %p60 = scmp.ne.s32.totalorder %s45, %s59
    %p61 = scmp.eq.s32.totalorder %s14, 0
    %p62 = por %p60, %p61
    %s63 = ssub.s32 %s8, %s15
    %p64 = scmp.eq.s32.totalorder %s63, 0
    %s66 = sadd.s32 %s65, 1
    %s67 = scalar_select %p64, %s65, %s66
    %p70 = pneg %p64
    %p71 = scmp.eq.s32.totalorder %s8, 1
    %p72 = por %p70, %p71
    %p73 = scmp.ne.s32.totalorder %s65, %s68
    %p74 = scmp.eq.s32.totalorder %s8, 0
    %p75 = por %p73, %p74
    %p76 = scmp.ne.s32.totalorder %s65, %s68
    %p77 = scmp.eq.s32.totalorder %s13, 1
    %p78 = por %p76, %p77
    %p79 = scmp.ne.s32.totalorder %s68, %s69
    %p80 = scmp.eq.s32.totalorder %s13, 0
    %p81 = por %p79, %p80
    %p82 = scmp.ne.s32.totalorder %s68, %s69
    %p83 = scmp.eq.s32.totalorder %s14, 1
    %p84 = por %p82, %p83
    %p86 = scmp.ne.s32.totalorder %s69, %s85
    %p87 = scmp.eq.s32.totalorder %s14, 0
    %p88 = por %p86, %p87
    %p89 = scmp.le.s32.totalorder 1, %s8
    %p90 = scmp.lt.s32.totalorder %s8, 3
    %p91 = pnand %p89, %p90
    %p92 = pneg %p91
    // Predicated region
    $region9: #{conv_bn_lrelu.3} parent=5 // pred_check
      _
    $region10: #{conv_bn_lrelu.3} parent=5 // pred_check_branch
      %94 = sbr.rel (%p91) target = $region12
    $region11: #{conv_bn_lrelu.3} parent=5 // pred_region
      %s95 = ssub.s32 %s8, 1
      // Predicated region
      $region13: #{conv_bn_lrelu.3} parent=11 // pred_check
        %p96 = pneg %p55
      $region14: #{conv_bn_lrelu.3} parent=11 // pred_check_branch
        %98 = sbr.rel (%p96) target = $region16
      $region15: #{conv_bn_lrelu.3} parent=11 // pred_region
        _
      $region16: #{conv_bn_lrelu.3} parent=11 // pred_fallthru
        _
    $region12: #{conv_bn_lrelu.3} parent=5 // pred_fallthru
      _
    %p99 = scmp.lt.s32.totalorder %s8, 2
    // Predicated region
    $region17: #{conv_bn_lrelu.3} parent=5 // pred_check
      %p100 = pneg %p99
    $region18: #{conv_bn_lrelu.3} parent=5 // pred_check_branch
      %102 = sbr.rel (%p100) target = $region20
    $region19: #{conv_bn_lrelu.3} parent=5 // pred_region
      // Predicated region
      $region21: #{conv_bn_lrelu.3} parent=19 // pred_check
        %p103 = pneg %p28
      $region22: #{conv_bn_lrelu.3} parent=19 // pred_check_branch
        %105 = sbr.rel (%p103) target = $region24
      $region23: #{conv_bn_lrelu.3} parent=19 // pred_region
        %p106 = scmp.lt.s32.totalorder %s8, 1
        %s107 = scalar_select %p106, %s8, 1
        %s108 = smul.addr %s107, 2
        %s109 = smul.addr %s108, 4
        %s110 = scalar_lea.vmem %s0, %s109
      $region24: #{conv_bn_lrelu.3} parent=19 // pred_fallthru
        _
    $region20: #{conv_bn_lrelu.3} parent=5 // pred_fallthru
      _
    %p111 = scmp.le.s32.totalorder 1, %s8
    %p112 = scmp.lt.s32.totalorder %s8, 3
    %p113 = pnand %p111, %p112
    %p114 = pneg %p113
    // Predicated region
    $region25: #{conv_bn_lrelu.3} parent=5 // pred_check
      _
    $region26: #{conv_bn_lrelu.3} parent=5 // pred_check_branch
      %116 = sbr.rel (%p113) target = $region28
    $region27: #{conv_bn_lrelu.3} parent=5 // pred_region
      %s117 = ssub.s32 %s8, 1
      %p118 = scmp.lt.s32.totalorder %s13, 1
      %s119 = scalar_select %p118, %s13, 1
      %s120 = smul.addr %s119, 2
      %s121 = smul.addr %s120, 4
      %s122 = scalar_lea.vmem %s0, %s121
      %p123 = pneg %p34
      %p124 = pneg %p31
      %p125 = pneg %p55
      %p126 = pneg %p52
      %p127 = pneg %p81
      %p128 = pneg %p78
      %p129 = scmp.lt.s32.totalorder %s13, 1
      %s130 = scalar_select %p129, %s13, 1
      %s131 = smul.addr %s130, 2
      %s132 = smul.addr %s131, 8
      %s133 = scalar_lea.vmem %s2, %s132
      %p134 = scmp.lt.s32.totalorder %s13, 1
      %s135 = scalar_select %p134, %s13, 1
      %s136 = smul.addr %s135, 2
      %s137 = smul.addr %s136, 4
      %s138 = scalar_lea.vmem %s0, %s137
      %p139 = scmp.lt.s32.totalorder %s13, 1
      %s140 = scalar_select %p139, %s13, 1
      %s141 = smul.addr %s140, 2
      %s142 = smul.addr %s141, 8
      %s143 = scalar_lea.vmem %s2, %s142
      %v144 = vld [vmem:[%s138] sm:$0xff]
      %v145 = vunpack.c.l.bf16 %v144
      %v146 = vunpack.c.h.bf16 %v144
      %v147 = vld [vmem:[%s1] sm:$0xff]
      %149 = vset.pattern.permute.xlu0 0
      %150 = vperm.xlu0 %149, %v147
      %v151 = vpop.permute.xlu0 %150
      %v153 = vmul.f32 %v145, %v151
      %v154 = vmul.f32 %v146, %v151
      %s155 = scalar_lea.vmem %s1, 8
      %v156 = vld [vmem:[%s155] sm:$0xff]
      %158 = vset.pattern.permute.xlu0 0
      %159 = vperm.xlu0 %158, %v156
      %v160 = vpop.permute.xlu0 %159
      %v162 = vadd.f32 %v153, %v160
      %v163 = vadd.f32 %v154, %v160
      %vm164 = vcmp.gt.f32.partialorder %v162, 0.0
      %vm165 = vcmp.gt.f32.partialorder %v163, 0.0
      %v166 = vmul.f32 %v162, 0.01
      %v167 = vmul.f32 %v163, 0.01
      %v168 = vsel %vm164, %v162, %v166
      %v169 = vsel %vm165, %v163, %v167
      %170 = vst [vmem:[%s143] sm:$0xff] %v168
      %171 = vst [vmem:[%s143 + $0x8] sm:$0xff] %v169
      %p172 = scmp.lt.s32.totalorder %s13, 1
      %s173 = scalar_select %p172, %s13, 1
      %s174 = smul.addr %s173, 2
      %s175 = smul.addr %s174, 8
      %s176 = scalar_lea.vmem %s2, %s175
      // Predicated region
      $region29: #{conv_bn_lrelu.3} parent=27 // pred_check
        %p177 = pneg %p78
      $region30: #{conv_bn_lrelu.3} parent=27 // pred_check_branch
        %179 = sbr.rel (%p177) target = $region32
      $region31: #{conv_bn_lrelu.3} parent=27 // pred_region
        _
      $region32: #{conv_bn_lrelu.3} parent=27 // pred_fallthru
        _
    $region28: #{conv_bn_lrelu.3} parent=5 // pred_fallthru
      _
    %p180 = scmp.le.s32.totalorder 2, %s8
    // Predicated region
    $region33: #{conv_bn_lrelu.3} parent=5 // pred_check
      %p181 = pneg %p180
    $region34: #{conv_bn_lrelu.3} parent=5 // pred_check_branch
      %183 = sbr.rel (%p181) target = $region36
    $region35: #{conv_bn_lrelu.3} parent=5 // pred_region
      %s184 = ssub.s32 %s8, 2
      // Predicated region
      $region37: #{conv_bn_lrelu.3} parent=35 // pred_check
        %p185 = pneg %p84
      $region38: #{conv_bn_lrelu.3} parent=35 // pred_check_branch
        %187 = sbr.rel (%p185) target = $region40
      $region39: #{conv_bn_lrelu.3} parent=35 // pred_region
        %p188 = scmp.lt.s32.totalorder %s14, 1
        %s189 = scalar_select %p188, %s14, 1
        %s190 = smul.addr %s189, 2
        %s191 = smul.addr %s190, 8
        %s192 = scalar_lea.vmem %s2, %s191
      $region40: #{conv_bn_lrelu.3} parent=35 // pred_fallthru
        _
    $region36: #{conv_bn_lrelu.3} parent=5 // pred_fallthru
      _
  $region6: #{conv_bn_lrelu.3} parent=0 // loop_footer
    %s12 = sadd.s32 1, %s8
  $region7: #{conv_bn_lrelu.3} parent=0 // loop_footer_branch
    %7 = sbr.rel target = $region3
  $region8: #{conv_bn_lrelu.3} parent=0 // loop_exit
    _

// kernel: conv_bn_lrelu.2
$region0: #{conv_bn_lrelu.2}
  #allocation0 [shape = 'u32[]', space=smem, size = 0x4, offset = 0x4, fixed_abs, tag = 'smem constant byte address 0x4 - core index']
  #allocation1 [shape = 'u32[72,128]{1,0:T(1,128)}', space=vmem, size = 0x9000, scoped, tag = 'internal scratch']
  %s0 = inlined_call_operand.vmem [shape: bf16[2,18,18,4], index: 0, kind: input, shape index: {}]
  %s1 = inlined_call_operand.vmem [shape: bf16[36,8], index: 1, kind: input, shape index: {}]
  %s2 = inlined_call_operand.vmem [shape: bf16[2,8,256], index: 2, kind: output, shape index: {0}]
  %s3 = inlined_call_operand.vmem [shape: f32[2,2,8], index: 3, kind: output, shape index: {1}]
  %4 = xla_tuple %s2, %s3
  %s5 = sld [smem:[#allocation0]]
  $region53: #{conv_bn_lrelu.2} parent=0
    _
  %s7 = ssub.s32 1, %s5
  %s8 = scalar_select 0, %s7, %s5
  loop: start=0, step=1, limit=4
  $region2: #{conv_bn_lrelu.2} parent=0 // loop_pre_header
    _
  $region3: #{conv_bn_lrelu.2} parent=0 // loop_header
    %s10 = sphi 0, %s14
    %p11 = scmp.ge.s32.totalorder %s10, 4
    %s17 = sphi 0, %s29
    %s18 = sphi 0, %s25
    %s19 = sphi 0, %s17
    %s20 = sphi 0, %s18
    %s21 = sphi 0, %s19
    %s22 = sphi 0, %s20
    %s34 = sphi 0, %s36
    %s37 = sphi 0, %s34
    %s38 = sphi 0, %s37
    %s54 = sphi 0, %s38
    %s58 = sphi 0, %s58
    %s60 = sphi 0, %s58
    %s61 = sphi 0, %s60
    %s75 = sphi 0, %s61
    %s83 = sphi 0, %s85
    %s86 = sphi 0, %s83
    %s87 = sphi 0, %s86
    %s103 = sphi 0, %s87
    %s109 = sphi 0, %s111
    %s112 = sphi 0, %s109
    %s113 = sphi 0, %s112
    %s129 = sphi 0, %s113
  $region4: #{conv_bn_lrelu.2} parent=0 // loop_header_branch
    %13 = sbr.rel (%p11) target = $region8
  $region5: #{conv_bn_lrelu.2} parent=0 // loop_body
    %s15 = ssub.s32 %s10, 1
    %s16 = ssub.s32 %s10, 2
    %s23 = sadd.s32 1, %s18
    %p24 = scmp.ge.s32.totalorder %s23, 1
    %s25 = scalar_select %p24, 0, %s23
    %s26 = sadd.s32 1, %s17
    %s27 = scalar_select %p24, %s26, %s17
    %p28 = scmp.ge.s32.totalorder %s27, 2
    %s29 = scalar_select %p28, 0, %s27
    %s30 = sadd.s32 %s17, %s18
    %s31 = sadd.s32 %s29, %s25
    %s32 = ssub.s32 %s30, %s31
    %p33 = scmp.eq.s32.totalorder %s32, 0
    %s35 = sadd.s32 %s34, 1
    %s36 = scalar_select %p33, %s34, %s35
    %p39 = pneg %p33
    %p40 = scmp.eq.s32.totalorder %s10, 1
    %p41 = por %p39, %p40
    %p42 = scmp.ne.s32.totalorder %s34, %s37
    %p43 = scmp.eq.s32.totalorder %s10, 0
    %p44 = por %p42, %p43
    %p45 = scmp.ne.s32.totalorder %s34, %s37
    %p46 = scmp.eq.s32.totalorder %s15, 1
    %p47 = por %p45, %p46
    %p48 = scmp.ne.s32.totalorder %s37, %s38
    %p49 = scmp.eq.s32.totalorder %s15, 0
    %p50 = por %p48, %p49
    %p51 = scmp.ne.s32.totalorder %s37, %s38
    %p52 = scmp.eq.s32.totalorder %s16, 1
    %p53 = por %p51, %p52
    %p55 = scmp.ne.s32.totalorder %s38, %s54
    %p56 = scmp.eq.s32.totalorder %s16, 0
    %p57 = por %p55, %p56
    %s59 = sadd.s32 %s58, 1
    %p62 = scmp.eq.s32.totalorder %s10, 1
    %p63 = scmp.ne.s32.totalorder %s58, %s60
    %p64 = scmp.eq.s32.totalorder %s10, 0
    %p65 = por %p63, %p64
    %p66 = scmp.ne.s32.totalorder %s58, %s60
    %p67 = scmp.eq.s32.totalorder %s15, 1
    %p68 = por %p66, %p67
    %p69 = scmp.ne.s32.totalorder %s60, %s61
    %p70 = scmp.eq.s32.totalorder %s15, 0
    %p71 = por %p69, %p70
    %p72 = scmp.ne.s32.totalorder %s60, %s61
    %p73 = scmp.eq.s32.totalorder %s16, 1
    %p74 = por %p72, %p73
    %p76 = scmp.ne.s32.totalorder %s61, %s75
    %p77 = scmp.eq.s32.totalorder %s16, 0
    %p78 = por %p76, %p77
    %s79 = sadd.s32 %s17, %s18
    %s80 = sadd.s32 %s29, %s25
    %s81 = ssub.s32 %s79, %s80
    %p82 = scmp.eq.s32.totalorder %s81, 0
    %s84 = sadd.s32 %s83, 1
    %s85 = scalar_select %p82, %s83, %s84
    %p88 = pneg %p82
    %p89 = scmp.eq.s32.totalorder %s10, 1
    %p90 = por %p88, %p89
    %p91 = scmp.ne.s32.totalorder %s83, %s86
    %p92 = scmp.eq.s32.totalorder %s10, 0
    %p93 = por %p91, %p92
    %p94 = scmp.ne.s32.totalorder %s83, %s86
    %p95 = scmp.eq.s32.totalorder %s15, 1
    %p96 = por %p94, %p95
    %p97 = scmp.ne.s32.totalorder %s86, %s87
    %p98 = scmp.eq.s32.totalorder %s15, 0
    %p99 = por %p97, %p98
    %p100 = scmp.ne.s32.totalorder %s86, %s87
    %p101 = scmp.eq.s32.totalorder %s16, 1
    %p102 = por %p100, %p101
    %p104 = scmp.ne.s32.totalorder %s87, %s103
    %p105 = scmp.eq.s32.totalorder %s16, 0
    %p106 = por %p104, %p105
    %s107 = ssub.s32 %s17, %s29
    %p108 = scmp.eq.s32.totalorder %s107, 0
    %s110 = sadd.s32 %s109, 1
    %s111 = scalar_select %p108, %s109, %s110
    %p114 = pneg %p108
    %p115 = scmp.eq.s32.totalorder %s10, 1
    %p116 = por %p114, %p115
    %p117 = scmp.ne.s32.totalorder %s109, %s112
    %p118 = scmp.eq.s32.totalorder %s10, 0
    %p119 = por %p117, %p118
    %p120 = scmp.ne.s32.totalorder %s109, %s112
    %p121 = scmp.eq.s32.totalorder %s15, 1
    %p122 = por %p120, %p121
    %p123 = scmp.ne.s32.totalorder %s112, %s113
    %p124 = scmp.eq.s32.totalorder %s15, 0
    %p125 = por %p123, %p124
    %p126 = scmp.ne.s32.totalorder %s112, %s113
    %p127 = scmp.eq.s32.totalorder %s16, 1
    %p128 = por %p126, %p127
    %p130 = scmp.ne.s32.totalorder %s113, %s129
    %p131 = scmp.eq.s32.totalorder %s16, 0
    %p132 = por %p130, %p131
    %p133 = scmp.le.s32.totalorder 1, %s10
    %p134 = scmp.lt.s32.totalorder %s10, 3
    %p135 = pnand %p133, %p134
    %p136 = pneg %p135
    // Predicated region
    $region9: #{conv_bn_lrelu.2} parent=5 // pred_check
      _
    $region10: #{conv_bn_lrelu.2} parent=5 // pred_check_branch
      %138 = sbr.rel (%p135) target = $region12
    $region11: #{conv_bn_lrelu.2} parent=5 // pred_region
      %s139 = ssub.s32 %s10, 1
      // Predicated region
      $region13: #{conv_bn_lrelu.2} parent=11 // pred_check
        %p140 = pneg %p71
      $region14: #{conv_bn_lrelu.2} parent=11 // pred_check_branch
        %142 = sbr.rel (%p140) target = $region16
      $region15: #{conv_bn_lrelu.2} parent=11 // pred_region
        _
      $region16: #{conv_bn_lrelu.2} parent=11 // pred_fallthru
        _
    $region12: #{conv_bn_lrelu.2} parent=5 // pred_fallthru
      _
    %p143 = scmp.lt.s32.totalorder %s10, 2
    // Predicated region
    $region17: #{conv_bn_lrelu.2} parent=5 // pred_check
      %p144 = pneg %p143
    $region18: #{conv_bn_lrelu.2} parent=5 // pred_check_branch
      %146 = sbr.rel (%p144) target = $region20
    $region19: #{conv_bn_lrelu.2} parent=5 // pred_region
      // Predicated region
      $region21: #{conv_bn_lrelu.2} parent=19 // pred_check
        %p147 = pneg %p44
      $region22: #{conv_bn_lrelu.2} parent=19 // pred_check_branch
        %149 = sbr.rel (%p147) target = $region24
      $region23: #{conv_bn_lrelu.2} parent=19 // pred_region
        %s150 = sadd.s32 %s17, %s18
        %p151 = scmp.lt.s32.totalorder %s150, 1
        %s152 = scalar_select %p151, %s150, 1
        %s153 = smul.addr %s152, 54
        %s154 = smul.addr %s153, 4
        %s155 = scalar_lea.vmem %s0, %s154
        %s156 = sadd.s32 %s17, %s18
      $region24: #{conv_bn_lrelu.2} parent=19 // pred_fallthru
        _
    $region20: #{conv_bn_lrelu.2} parent=5 // pred_fallthru
      _
    %p157 = scmp.le.s32.totalorder 1, %s10
    %p158 = scmp.lt.s32.totalorder %s10, 3
    %p159 = pnand %p157, %p158
    %p160 = pneg %p159
    // Predicated region
    $region25: #{conv_bn_lrelu.2} parent=5 // pred_check
      _
    $region26: #{conv_bn_lrelu.2} parent=5 // pred_check_branch
      %162 = sbr.rel (%p159) target = $region28
    $region27: #{conv_bn_lrelu.2} parent=5 // pred_region
      %s163 = ssub.s32 %s10, 1
      %s164 = sadd.s32 %s19, %s20
      %p165 = scmp.lt.s32.totalorder %s164, 1
      %s166 = scalar_select %p165, %s164, 1
      %s167 = smul.addr %s166, 54
      %s168 = smul.addr %s167, 4
      %s169 = scalar_lea.vmem %s0, %s168
      %p170 = pneg %p50
      %p171 = pneg %p47
      %p172 = pneg %p71
      %p173 = pneg %p68
      %p174 = pneg %p99
      %p175 = pneg %p96
      %s176 = sadd.s32 %s19, %s20
      %p177 = scmp.lt.s32.totalorder %s176, 1
      %s178 = scalar_select %p177, %s176, 1
      %s179 = smul.addr %s178, 2
      %s180 = smul.addr %s179, 4
      %s181 = scalar_lea.vmem %s2, %s180
      %p182 = pneg %p125
      %p183 = pneg %p122
      %p184 = scmp.lt.s32.totalorder %s19, 1
      %s185 = scalar_select %p184, %s19, 1
      %s186 = smul.addr %s185, 2
      %s187 = scalar_lea.vmem %s3, %s186
      %s188 = sadd.s32 %s19, %s20
      %p189 = scmp.lt.s32.totalorder %s188, 1
      %s190 = scalar_select %p189, %s188, 1
      %s191 = smul.addr %s190, 54
      %s192 = smul.addr %s191, 4
      %s193 = scalar_lea.vmem %s0, %s192
      %s194 = sadd.s32 %s19, %s20
      %s195 = sadd.s32 %s19, %s20
      %p196 = scmp.lt.s32.totalorder %s195, 1
      %s197 = scalar_select %p196, %s195, 1
      %s198 = smul.addr %s197, 2
      %s199 = smul.addr %s198, 4
      %s200 = scalar_lea.vmem %s2, %s199
      %s201 = sadd.s32 %s19, %s20
      %p202 = scmp.lt.s32.totalorder %s19, 1
      %s203 = scalar_select %p202, %s19, 1
      %s204 = smul.addr %s203, 2
      %s205 = scalar_lea.vmem %s3, %s204
      %v207 = vld [vmem:[%s193] sm:$0xf]
      %v208 = vld [vmem:[%s193 + $0x4] sm:$0xf]
      %v209 = vld [vmem:[%s193 + $0x8] sm:$0x1]
      %v210 = vld [vmem:[%s193 + $0xc] sm:$0xf]
      %v211 = vld [vmem:[%s193 + $0x10] sm:$0xf]
      %v212 = vld [vmem:[%s193 + $0x14] sm:$0x1]
      %v213 = vld [vmem:[%s193 + $0x18] sm:$0xf]
      %v214 = vld [vmem:[%s193 + $0x1c] sm:$0xf]
      %v215 = vld [vmem:[%s193 + $0x20] sm:$0x1]
      %v216 = vld [vmem:[%s193 + $0x24] sm:$0xf]
      %v217 = vld [vmem:[%s193 + $0x28] sm:$0xf]
      %v218 = vld [vmem:[%s193 + $0x2c] sm:$0x1]
      %v219 = vld [vmem:[%s193 + $0x30] sm:$0xf]
      %v220 = vld [vmem:[%s193 + $0x34] sm:$0xf]
      %v221 = vld [vmem:[%s193 + $0x38] sm:$0x1]
      %v222 = vld [vmem:[%s193 + $0x3c] sm:$0xf]
      %v223 = vld [vmem:[%s193 + $0x40] sm:$0xf]
      %v224 = vld [vmem:[%s193 + $0x44] sm:$0x1]
      %v225 = vld [vmem:[%s193 + $0x48] sm:$0xf]
      %v226 = vld [vmem:[%s193 + $0x4c] sm:$0xf]
      %v227 = vld [vmem:[%s193 + $0x50] sm:$0x1]
      %v228 = vld [vmem:[%s193 + $0x54] sm:$0xf]
      %v229 = vld [vmem:[%s193 + $0x58] sm:$0xf]
      %v230 = vld [vmem:[%s193 + $0x5c] sm:$0x1]
      %v231 = vld [vmem:[%s193 + $0x60] sm:$0xf]
      %v232 = vld [vmem:[%s193 + $0x64] sm:$0xf]
      %v233 = vld [vmem:[%s193 + $0x68] sm:$0x1]
      %v234 = vld [vmem:[%s193 + $0x6c] sm:$0xf]
      %v235 = vld [vmem:[%s193 + $0x70] sm:$0xf]
      %v236 = vld [vmem:[%s193 + $0x74] sm:$0x1]
      %v237 = vld [vmem:[%s193 + $0x78] sm:$0xf]
      %v238 = vld [vmem:[%s193 + $0x7c] sm:$0xf]
      %v239 = vld [vmem:[%s193 + $0x80] sm:$0x1]
      %v240 = vld [vmem:[%s193 + $0x84] sm:$0xf]
      %v241 = vld [vmem:[%s193 + $0x88] sm:$0xf]
      %v242 = vld [vmem:[%s193 + $0x8c] sm:$0x1]
      %v243 = vld [vmem:[%s193 + $0x90] sm:$0xf]
      %v244 = vld [vmem:[%s193 + $0x94] sm:$0xf]
      %v245 = vld [vmem:[%s193 + $0x98] sm:$0x1]
      %v246 = vld [vmem:[%s193 + $0x9c] sm:$0xf]
      %v247 = vld [vmem:[%s193 + $0xa0] sm:$0xf]
      %v248 = vld [vmem:[%s193 + $0xa4] sm:$0x1]
      %v249 = vld [vmem:[%s193 + $0xa8] sm:$0xf]
      %v250 = vld [vmem:[%s193 + $0xac] sm:$0xf]
      %v251 = vld [vmem:[%s193 + $0xb0] sm:$0x1]
      %v252 = vld [vmem:[%s193 + $0xb4] sm:$0xf]
      %v253 = vld [vmem:[%s193 + $0xb8] sm:$0xf]
      %v254 = vld [vmem:[%s193 + $0xbc] sm:$0x1]
      %v255 = vld [vmem:[%s193 + $0xc0] sm:$0xf]
      %v256 = vld [vmem:[%s193 + $0xc4] sm:$0xf]
      %v257 = vld [vmem:[%s193 + $0xc8] sm:$0x1]
      %v258 = vld [vmem:[%s193 + $0xcc] sm:$0xf]
      %v259 = vld [vmem:[%s193 + $0xd0] sm:$0xf]
      %v260 = vld [vmem:[%s193 + $0xd4] sm:$0x1]
      %v293 = vunpack.c.l.b16 %v207
      %v294 = vunpack.c.l.b16 %v208
      %v295 = vunpack.c.l.b16 %v210
      %v296 = vunpack.c.l.b16 %v211
      %v297 = vunpack.c.l.b16 %v213
      %v298 = vunpack.c.l.b16 %v214
      %v299 = vunpack.c.l.b16 %v216
      %v300 = vunpack.c.l.b16 %v217
      %v301 = vunpack.c.l.b16 %v219
      %v302 = vunpack.c.l.b16 %v220
      %v303 = vunpack.c.l.b16 %v222
      %v304 = vunpack.c.l.b16 %v223
      %v305 = vunpack.c.l.b16 %v225
      %v306 = vunpack.c.l.b16 %v226
      %v307 = vunpack.c.l.b16 %v228
      %v308 = vunpack.c.l.b16 %v229
      %v309 = vunpack.c.l.b16 %v231
      %v310 = vunpack.c.l.b16 %v232
      %v311 = vunpack.c.l.b16 %v234
      %v312 = vunpack.c.l.b16 %v235
      %v313 = vunpack.c.l.b16 %v237
      %v314 = vunpack.c.l.b16 %v238
      %v315 = vunpack.c.l.b16 %v240
      %v316 = vunpack.c.l.b16 %v241
      %v317 = vunpack.c.l.b16 %v243
      %v318 = vunpack.c.l.b16 %v244
      %v319 = vunpack.c.l.b16 %v246
      %v320 = vunpack.c.l.b16 %v247
      %v321 = vunpack.c.l.b16 %v249
      %v322 = vunpack.c.l.b16 %v250
      %v323 = vunpack.c.l.b16 %v252
      %v324 = vunpack.c.l.b16 %v253
      %v325 = vpack.c.b16 %v294, %v293
      %v326 = vpack.c.b16 %v296, %v295
      %v327 = vpack.c.b16 %v298, %v297
      %v328 = vpack.c.b16 %v300, %v299
      %v329 = vpack.c.b16 %v302, %v301
      %v330 = vpack.c.b16 %v304, %v303
      %v331 = vpack.c.b16 %v306, %v305
      %v332 = vpack.c.b16 %v308, %v307
      %v333 = vpack.c.b16 %v310, %v309
      %v334 = vpack.c.b16 %v312, %v311
      %v335 = vpack.c.b16 %v314, %v313
      %v336 = vpack.c.b16 %v316, %v315
      %v337 = vpack.c.b16 %v318, %v317
      %v338 = vpack.c.b16 %v320, %v319
      %v339 = vpack.c.b16 %v322, %v321
      %v340 = vpack.c.b16 %v324, %v323
      %v357 = vunpack.c.l.b16 %v209
      %v358 = vunpack.c.l.b16 %v212
      %v359 = vunpack.c.l.b16 %v215
      %v360 = vunpack.c.l.b16 %v218
      %v361 = vunpack.c.l.b16 %v221
      %v362 = vunpack.c.l.b16 %v224
      %v363 = vunpack.c.l.b16 %v227
      %v364 = vunpack.c.l.b16 %v230
      %v365 = vunpack.c.l.b16 %v233
      %v366 = vunpack.c.l.b16 %v236
      %v367 = vunpack.c.l.b16 %v239
      %v368 = vunpack.c.l.b16 %v242
      %v369 = vunpack.c.l.b16 %v245
      %v370 = vunpack.c.l.b16 %v248
      %v371 = vunpack.c.l.b16 %v251
      %v372 = vunpack.c.l.b16 %v254
      %v373 = vpack.c.b16 %v357, %v357
      %v374 = vpack.c.b16 %v358, %v358
      %v375 = vpack.c.b16 %v359, %v359
      %v376 = vpack.c.b16 %v360, %v360
      %v377 = vpack.c.b16 %v361, %v361
      %v378 = vpack.c.b16 %v362, %v362
      %v379 = vpack.c.b16 %v363, %v363
      %v380 = vpack.c.b16 %v364, %v364
      %v381 = vpack.c.b16 %v365, %v365
      %v382 = vpack.c.b16 %v366, %v366
      %v383 = vpack.c.b16 %v367, %v367
      %v384 = vpack.c.b16 %v368, %v368
      %v385 = vpack.c.b16 %v369, %v369
      %v386 = vpack.c.b16 %v370, %v370
      %v387 = vpack.c.b16 %v371, %v371
      %v388 = vpack.c.b16 %v372, %v372
      %vm389 = vsmask.f32 7424
      %v391 = vshrl.u32 %v325, 16
      %v393 = vshll.u32 %v325, 16
      %v395 = vrot.slane %v393, 1
      %v396 = vor.u32 %v391, %v395
      %v398 = vshll.u32 %v373, 16
      %v400 = vrot.slane %v398, 1
      %v401 = vsel %vm389, %v396, %v400
      %v403 = vshrl.u32 %v326, 16
      %v405 = vshll.u32 %v326, 16
      %v407 = vrot.slane %v405, 1
      %v408 = vor.u32 %v403, %v407
      %v410 = vshll.u32 %v374, 16
      %v412 = vrot.slane %v410, 1
      %v413 = vsel %vm389, %v408, %v412
      %v415 = vshrl.u32 %v327, 16
      %v417 = vshll.u32 %v327, 16
      %v419 = vrot.slane %v417, 1
      %v420 = vor.u32 %v415, %v419
      %v422 = vshll.u32 %v375, 16
      %v424 = vrot.slane %v422, 1
      %v425 = vsel %vm389, %v420, %v424
      %v427 = vshrl.u32 %v328, 16
      %v429 = vshll.u32 %v328, 16
      %v431 = vrot.slane %v429, 1
      %v432 = vor.u32 %v427, %v431
      %v434 = vshll.u32 %v376, 16
      %v436 = vrot.slane %v434, 1
      %v437 = vsel %vm389, %v432, %v436
      %v439 = vshrl.u32 %v329, 16
      %v441 = vshll.u32 %v329, 16
      %v443 = vrot.slane %v441, 1
      %v444 = vor.u32 %v439, %v443
      %v446 = vshll.u32 %v377, 16
      %v448 = vrot.slane %v446, 1
      %v449 = vsel %vm389, %v444, %v448
      %v451 = vshrl.u32 %v330, 16
      %v453 = vshll.u32 %v330, 16
      %v455 = vrot.slane %v453, 1
      %v456 = vor.u32 %v451, %v455
      %v458 = vshll.u32 %v378, 16
      %v460 = vrot.slane %v458, 1
      %v461 = vsel %vm389, %v456, %v460
      %v463 = vshrl.u32 %v331, 16
      %v465 = vshll.u32 %v331, 16
      %v467 = vrot.slane %v465, 1
      %v468 = vor.u32 %v463, %v467
      %v470 = vshll.u32 %v379, 16
      %v472 = vrot.slane %v470, 1
      %v473 = vsel %vm389, %v468, %v472
      %v475 = vshrl.u32 %v332, 16
      %v477 = vshll.u32 %v332, 16
      %v479 = vrot.slane %v477, 1
      %v480 = vor.u32 %v475, %v479
      %v482 = vshll.u32 %v380, 16
      %v484 = vrot.slane %v482, 1
      %v485 = vsel %vm389, %v480, %v484
      %v487 = vshrl.u32 %v333, 16
      %v489 = vshll.u32 %v333, 16
      %v491 = vrot.slane %v489, 1
      %v492 = vor.u32 %v487, %v491
      %v494 = vshll.u32 %v381, 16
      %v496 = vrot.slane %v494, 1
      %v497 = vsel %vm389, %v492, %v496
      %v499 = vshrl.u32 %v334, 16
      %v501 = vshll.u32 %v334, 16
      %v503 = vrot.slane %v501, 1
      %v504 = vor.u32 %v499, %v503
      %v506 = vshll.u32 %v382, 16
      %v508 = vrot.slane %v506, 1
      %v509 = vsel %vm389, %v504, %v508
      %v511 = vshrl.u32 %v335, 16
      %v513 = vshll.u32 %v335, 16
      %v515 = vrot.slane %v513, 1
      %v516 = vor.u32 %v511, %v515
      %v518 = vshll.u32 %v383, 16
      %v520 = vrot.slane %v518, 1
      %v521 = vsel %vm389, %v516, %v520
      %v523 = vshrl.u32 %v336, 16
      %v525 = vshll.u32 %v336, 16
      %v527 = vrot.slane %v525, 1
      %v528 = vor.u32 %v523, %v527
      %v530 = vshll.u32 %v384, 16
      %v532 = vrot.slane %v530, 1
      %v533 = vsel %vm389, %v528, %v532
      %v535 = vshrl.u32 %v337, 16
      %v537 = vshll.u32 %v337, 16
      %v539 = vrot.slane %v537, 1
      %v540 = vor.u32 %v535, %v539
      %v542 = vshll.u32 %v385, 16
      %v544 = vrot.slane %v542, 1
      %v545 = vsel %vm389, %v540, %v544
      %v547 = vshrl.u32 %v338, 16
      %v549 = vshll.u32 %v338, 16
      %v551 = vrot.slane %v549, 1
      %v552 = vor.u32 %v547, %v551
      %v554 = vshll.u32 %v386, 16
      %v556 = vrot.slane %v554, 1
      %v557 = vsel %vm389, %v552, %v556
      %v559 = vshrl.u32 %v339, 16
      %v561 = vshll.u32 %v339, 16
      %v563 = vrot.slane %v561, 1
      %v564 = vor.u32 %v559, %v563
      %v566 = vshll.u32 %v387, 16
      %v568 = vrot.slane %v566, 1
      %v569 = vsel %vm389, %v564, %v568
      %v571 = vshrl.u32 %v340, 16
      %v573 = vshll.u32 %v340, 16
      %v575 = vrot.slane %v573, 1
      %v576 = vor.u32 %v571, %v575
      %v578 = vshll.u32 %v388, 16
      %v580 = vrot.slane %v578, 1
      %v581 = vsel %vm389, %v576, %v580
      %582 = vrot.lane.b32.xlu0 %v401, 4
      %v583 = vpop.permute.xlu0 %582
      %584 = vrot.lane.b32.xlu0 %v413, 4
      %v585 = vpop.permute.xlu0 %584
      %586 = vrot.lane.b32.xlu0 %v425, 4
      %v587 = vpop.permute.xlu0 %586
      %588 = vrot.lane.b32.xlu0 %v437, 4
      %v589 = vpop.permute.xlu0 %588
      %590 = vrot.lane.b32.xlu0 %v449, 4
      %v591 = vpop.permute.xlu0 %590
      %592 = vrot.lane.b32.xlu0 %v461, 4
      %v593 = vpop.permute.xlu0 %592
      %594 = vrot.lane.b32.xlu0 %v473, 4
      %v595 = vpop.permute.xlu0 %594
      %596 = vrot.lane.b32.xlu0 %v485, 4
      %v597 = vpop.permute.xlu0 %596
      %598 = vrot.lane.b32.xlu0 %v497, 4
      %v599 = vpop.permute.xlu0 %598
      %600 = vrot.lane.b32.xlu0 %v509, 4
      %v601 = vpop.permute.xlu0 %600
      %602 = vrot.lane.b32.xlu0 %v521, 4
      %v603 = vpop.permute.xlu0 %602
      %604 = vrot.lane.b32.xlu0 %v533, 4
      %v605 = vpop.permute.xlu0 %604
      %606 = vrot.lane.b32.xlu0 %v545, 4
      %v607 = vpop.permute.xlu0 %606
      %608 = vrot.lane.b32.xlu0 %v557, 4
      %v609 = vpop.permute.xlu0 %608
      %610 = vrot.lane.b32.xlu0 %v569, 4
      %v611 = vpop.permute.xlu0 %610
      %612 = vrot.lane.b32.xlu0 %v581, 4
      %v613 = vpop.permute.xlu0 %612
      %vm614 = vcmask 1046528
      %v615 = vrot.slane %v325, 1
      %v616 = vrot.slane %v373, 1
      %v617 = vsel %vm614, %v615, %v616
      %v618 = vrot.slane %v326, 1
      %v619 = vrot.slane %v374, 1
      %v620 = vsel %vm614, %v618, %v619
      %v621 = vrot.slane %v327, 1
      %v622 = vrot.slane %v375, 1
      %v623 = vsel %vm614, %v621, %v622
      %v624 = vrot.slane %v328, 1
      %v625 = vrot.slane %v376, 1
      %v626 = vsel %vm614, %v624, %v625
      %v627 = vrot.slane %v329, 1
      %v628 = vrot.slane %v377, 1
      %v629 = vsel %vm614, %v627, %v628
      %v630 = vrot.slane %v330, 1
      %v631 = vrot.slane %v378, 1
      %v632 = vsel %vm614, %v630, %v631
      %v633 = vrot.slane %v331, 1
      %v634 = vrot.slane %v379, 1
      %v635 = vsel %vm614, %v633, %v634
      %v636 = vrot.slane %v332, 1
      %v637 = vrot.slane %v380, 1
      %v638 = vsel %vm614, %v636, %v637
      %v639 = vrot.slane %v333, 1
      %v640 = vrot.slane %v381, 1
      %v641 = vsel %vm614, %v639, %v640
      %v642 = vrot.slane %v334, 1
      %v643 = vrot.slane %v382, 1
      %v644 = vsel %vm614, %v642, %v643
      %v645 = vrot.slane %v335, 1
      %v646 = vrot.slane %v383, 1
      %v647 = vsel %vm614, %v645, %v646
      %v648 = vrot.slane %v336, 1
      %v649 = vrot.slane %v384, 1
      %v650 = vsel %vm614, %v648, %v649
      %v651 = vrot.slane %v337, 1
      %v652 = vrot.slane %v385, 1
      %v653 = vsel %vm614, %v651, %v652
      %v654 = vrot.slane %v338, 1
      %v655 = vrot.slane %v386, 1
      %v656 = vsel %vm614, %v654, %v655
      %v657 = vrot.slane %v339, 1
      %v658 = vrot.slane %v387, 1
      %v659 = vsel %vm614, %v657, %v658
      %v660 = vrot.slane %v340, 1
      %v661 = vrot.slane %v388, 1
      %v662 = vsel %vm614, %v660, %v661
      %663 = vrot.lane.b32.xlu0 %v617, 8
      %v664 = vpop.permute.xlu0 %663
      %665 = vrot.lane.b32.xlu0 %v620, 8
      %v666 = vpop.permute.xlu0 %665
      %667 = vrot.lane.b32.xlu0 %v623, 8
      %v668 = vpop.permute.xlu0 %667
      %669 = vrot.lane.b32.xlu0 %v626, 8
      %v670 = vpop.permute.xlu0 %669
      %671 = vrot.lane.b32.xlu0 %v629, 8
      %v672 = vpop.permute.xlu0 %671
      %673 = vrot.lane.b32.xlu0 %v632, 8
      %v674 = vpop.permute.xlu0 %673
      %675 = vrot.lane.b32.xlu0 %v635, 8
      %v676 = vpop.permute.xlu0 %675
      %677 = vrot.lane.b32.xlu0 %v638, 8
      %v678 = vpop.permute.xlu0 %677
      %679 = vrot.lane.b32.xlu0 %v641, 8
      %v680 = vpop.permute.xlu0 %679
      %681 = vrot.lane.b32.xlu0 %v644, 8
      %v682 = vpop.permute.xlu0 %681
      %683 = vrot.lane.b32.xlu0 %v647, 8
      %v684 = vpop.permute.xlu0 %683
      %685 = vrot.lane.b32.xlu0 %v650, 8
      %v686 = vpop.permute.xlu0 %685
      %687 = vrot.lane.b32.xlu0 %v653, 8
      %v688 = vpop.permute.xlu0 %687
      %689 = vrot.lane.b32.xlu0 %v656, 8
      %v690 = vpop.permute.xlu0 %689
      %691 = vrot.lane.b32.xlu0 %v659, 8
      %v692 = vpop.permute.xlu0 %691
      %693 = vrot.lane.b32.xlu0 %v662, 8
      %v694 = vpop.permute.xlu0 %693
      %v697 = vunpack.c.l.b16 %v255
      %v698 = vunpack.c.l.b16 %v256
      %v699 = vpack.c.b16 %v698, %v697
      %700 = vrot.lane.b32.xlu0 %v326, 12
      %v701 = vpop.permute.xlu0 %700
      %702 = vrot.lane.b32.xlu0 %v327, 12
      %v703 = vpop.permute.xlu0 %702
      %704 = vrot.lane.b32.xlu0 %v328, 12
      %v705 = vpop.permute.xlu0 %704
      %706 = vrot.lane.b32.xlu0 %v329, 12
      %v707 = vpop.permute.xlu0 %706
      %708 = vrot.lane.b32.xlu0 %v330, 12
      %v709 = vpop.permute.xlu0 %708
      %710 = vrot.lane.b32.xlu0 %v331, 12
      %v711 = vpop.permute.xlu0 %710
      %712 = vrot.lane.b32.xlu0 %v332, 12
      %v713 = vpop.permute.xlu0 %712
      %714 = vrot.lane.b32.xlu0 %v333, 12
      %v715 = vpop.permute.xlu0 %714
      %716 = vrot.lane.b32.xlu0 %v334, 12
      %v717 = vpop.permute.xlu0 %716
      %718 = vrot.lane.b32.xlu0 %v335, 12
      %v719 = vpop.permute.xlu0 %718
      %720 = vrot.lane.b32.xlu0 %v336, 12
      %v721 = vpop.permute.xlu0 %720
      %722 = vrot.lane.b32.xlu0 %v337, 12
      %v723 = vpop.permute.xlu0 %722
      %724 = vrot.lane.b32.xlu0 %v338, 12
      %v725 = vpop.permute.xlu0 %724
      %726 = vrot.lane.b32.xlu0 %v339, 12
      %v727 = vpop.permute.xlu0 %726
      %728 = vrot.lane.b32.xlu0 %v340, 12
      %v729 = vpop.permute.xlu0 %728
      %730 = vrot.lane.b32.xlu0 %v699, 12
      %v731 = vpop.permute.xlu0 %730
      %v733 = vunpack.c.l.b16 %v257
      %v734 = vpack.c.b16 %v733, %v733
      %v736 = vshrl.u32 %v699, 16
      %v738 = vshll.u32 %v699, 16
      %v740 = vrot.slane %v738, 1
      %v741 = vor.u32 %v736, %v740
      %v743 = vshll.u32 %v734, 16
      %v745 = vrot.slane %v743, 1
      %v746 = vsel %vm389, %v741, %v745
      %747 = vrot.lane.b32.xlu0 %v413, 16
      %v748 = vpop.permute.xlu0 %747
      %749 = vrot.lane.b32.xlu0 %v425, 16
      %v750 = vpop.permute.xlu0 %749
      %751 = vrot.lane.b32.xlu0 %v437, 16
      %v752 = vpop.permute.xlu0 %751
      %753 = vrot.lane.b32.xlu0 %v449, 16
      %v754 = vpop.permute.xlu0 %753
      %755 = vrot.lane.b32.xlu0 %v461, 16
      %v756 = vpop.permute.xlu0 %755
      %757 = vrot.lane.b32.xlu0 %v473, 16
      %v758 = vpop.permute.xlu0 %757
      %759 = vrot.lane.b32.xlu0 %v485, 16
      %v760 = vpop.permute.xlu0 %759
      %761 = vrot.lane.b32.xlu0 %v497, 16
      %v762 = vpop.permute.xlu0 %761
      %763 = vrot.lane.b32.xlu0 %v509, 16
      %v764 = vpop.permute.xlu0 %763
      %765 = vrot.lane.b32.xlu0 %v521, 16
      %v766 = vpop.permute.xlu0 %765
      %767 = vrot.lane.b32.xlu0 %v533, 16
      %v768 = vpop.permute.xlu0 %767
      %769 = vrot.lane.b32.xlu0 %v545, 16
      %v770 = vpop.permute.xlu0 %769
      %771 = vrot.lane.b32.xlu0 %v557, 16
      %v772 = vpop.permute.xlu0 %771
      %773 = vrot.lane.b32.xlu0 %v569, 16
      %v774 = vpop.permute.xlu0 %773
      %775 = vrot.lane.b32.xlu0 %v581, 16
      %v776 = vpop.permute.xlu0 %775
      %777 = vrot.lane.b32.xlu0 %v746, 16
      %v778 = vpop.permute.xlu0 %777
      %v779 = vrot.slane %v699, 1
      %v780 = vrot.slane %v734, 1
      %v781 = vsel %vm614, %v779, %v780
      %782 = vrot.lane.b32.xlu0 %v620, 20
      %v783 = vpop.permute.xlu0 %782
      %784 = vrot.lane.b32.xlu0 %v623, 20
      %v785 = vpop.permute.xlu0 %784
      %786 = vrot.lane.b32.xlu0 %v626, 20
      %v787 = vpop.permute.xlu0 %786
      %788 = vrot.lane.b32.xlu0 %v629, 20
      %v789 = vpop.permute.xlu0 %788
      %790 = vrot.lane.b32.xlu0 %v632, 20
      %v791 = vpop.permute.xlu0 %790
      %792 = vrot.lane.b32.xlu0 %v635, 20
      %v793 = vpop.permute.xlu0 %792
      %794 = vrot.lane.b32.xlu0 %v638, 20
      %v795 = vpop.permute.xlu0 %794
      %796 = vrot.lane.b32.xlu0 %v641, 20
      %v797 = vpop.permute.xlu0 %796
      %798 = vrot.lane.b32.xlu0 %v644, 20
      %v799 = vpop.permute.xlu0 %798
      %800 = vrot.lane.b32.xlu0 %v647, 20
      %v801 = vpop.permute.xlu0 %800
      %802 = vrot.lane.b32.xlu0 %v650, 20
      %v803 = vpop.permute.xlu0 %802
      %804 = vrot.lane.b32.xlu0 %v653, 20
      %v805 = vpop.permute.xlu0 %804
      %806 = vrot.lane.b32.xlu0 %v656, 20
      %v807 = vpop.permute.xlu0 %806
      %808 = vrot.lane.b32.xlu0 %v659, 20
      %v809 = vpop.permute.xlu0 %808
      %810 = vrot.lane.b32.xlu0 %v662, 20
      %v811 = vpop.permute.xlu0 %810
      %812 = vrot.lane.b32.xlu0 %v781, 20
      %v813 = vpop.permute.xlu0 %812
      %v816 = vunpack.c.l.b16 %v258
      %v817 = vunpack.c.l.b16 %v259
      %v818 = vpack.c.b16 %v817, %v816
      %819 = vrot.lane.b32.xlu0 %v327, 24
      %v820 = vpop.permute.xlu0 %819
      %821 = vrot.lane.b32.xlu0 %v328, 24
      %v822 = vpop.permute.xlu0 %821
      %823 = vrot.lane.b32.xlu0 %v329, 24
      %v824 = vpop.permute.xlu0 %823
      %825 = vrot.lane.b32.xlu0 %v330, 24
      %v826 = vpop.permute.xlu0 %825
      %827 = vrot.lane.b32.xlu0 %v331, 24
      %v828 = vpop.permute.xlu0 %827
      %829 = vrot.lane.b32.xlu0 %v332, 24
      %v830 = vpop.permute.xlu0 %829
      %831 = vrot.lane.b32.xlu0 %v333, 24
      %v832 = vpop.permute.xlu0 %831
      %833 = vrot.lane.b32.xlu0 %v334, 24
      %v834 = vpop.permute.xlu0 %833
      %835 = vrot.lane.b32.xlu0 %v335, 24
      %v836 = vpop.permute.xlu0 %835
      %837 = vrot.lane.b32.xlu0 %v336, 24
      %v838 = vpop.permute.xlu0 %837
      %839 = vrot.lane.b32.xlu0 %v337, 24
      %v840 = vpop.permute.xlu0 %839
      %841 = vrot.lane.b32.xlu0 %v338, 24
      %v842 = vpop.permute.xlu0 %841
      %843 = vrot.lane.b32.xlu0 %v339, 24
      %v844 = vpop.permute.xlu0 %843
      %845 = vrot.lane.b32.xlu0 %v340, 24
      %v846 = vpop.permute.xlu0 %845
      %847 = vrot.lane.b32.xlu0 %v699, 24
      %v848 = vpop.permute.xlu0 %847
      %849 = vrot.lane.b32.xlu0 %v818, 24
      %v850 = vpop.permute.xlu0 %849
      %v852 = vunpack.c.l.b16 %v260
      %v853 = vpack.c.b16 %v852, %v852
      %v855 = vshrl.u32 %v818, 16
      %v857 = vshll.u32 %v818, 16
      %v859 = vrot.slane %v857, 1
      %v860 = vor.u32 %v855, %v859
      %v862 = vshll.u32 %v853, 16
      %v864 = vrot.slane %v862, 1
      %v865 = vsel %vm389, %v860, %v864
      %866 = vrot.lane.b32.xlu0 %v425, 28
      %v867 = vpop.permute.xlu0 %866
      %868 = vrot.lane.b32.xlu0 %v437, 28
      %v869 = vpop.permute.xlu0 %868
      %870 = vrot.lane.b32.xlu0 %v449, 28
      %v871 = vpop.permute.xlu0 %870
      %872 = vrot.lane.b32.xlu0 %v461, 28
      %v873 = vpop.permute.xlu0 %872
      %874 = vrot.lane.b32.xlu0 %v473, 28
      %v875 = vpop.permute.xlu0 %874
      %876 = vrot.lane.b32.xlu0 %v485, 28
      %v877 = vpop.permute.xlu0 %876
      %878 = vrot.lane.b32.xlu0 %v497, 28
      %v879 = vpop.permute.xlu0 %878
      %880 = vrot.lane.b32.xlu0 %v509, 28
      %v881 = vpop.permute.xlu0 %880
      %882 = vrot.lane.b32.xlu0 %v521, 28
      %v883 = vpop.permute.xlu0 %882
      %884 = vrot.lane.b32.xlu0 %v533, 28
      %v885 = vpop.permute.xlu0 %884
      %886 = vrot.lane.b32.xlu0 %v545, 28
      %v887 = vpop.permute.xlu0 %886
      %888 = vrot.lane.b32.xlu0 %v557, 28
      %v889 = vpop.permute.xlu0 %888
      %890 = vrot.lane.b32.xlu0 %v569, 28
      %v891 = vpop.permute.xlu0 %890
      %892 = vrot.lane.b32.xlu0 %v581, 28
      %v893 = vpop.permute.xlu0 %892
      %894 = vrot.lane.b32.xlu0 %v746, 28
      %v895 = vpop.permute.xlu0 %894
      %896 = vrot.lane.b32.xlu0 %v865, 28
      %v897 = vpop.permute.xlu0 %896
      %v898 = vrot.slane %v818, 1
      %v899 = vrot.slane %v853, 1
      %v900 = vsel %vm614, %v898, %v899
      %901 = vrot.lane.b32.xlu0 %v623, 32
      %v902 = vpop.permute.xlu0 %901
      %903 = vrot.lane.b32.xlu0 %v626, 32
      %v904 = vpop.permute.xlu0 %903
      %905 = vrot.lane.b32.xlu0 %v629, 32
      %v906 = vpop.permute.xlu0 %905
      %907 = vrot.lane.b32.xlu0 %v632, 32
      %v908 = vpop.permute.xlu0 %907
      %909 = vrot.lane.b32.xlu0 %v635, 32
      %v910 = vpop.permute.xlu0 %909
      %911 = vrot.lane.b32.xlu0 %v638, 32
      %v912 = vpop.permute.xlu0 %911
      %913 = vrot.lane.b32.xlu0 %v641, 32
      %v914 = vpop.permute.xlu0 %913
      %915 = vrot.lane.b32.xlu0 %v644, 32
      %v916 = vpop.permute.xlu0 %915
      %917 = vrot.lane.b32.xlu0 %v647, 32
      %v918 = vpop.permute.xlu0 %917
      %919 = vrot.lane.b32.xlu0 %v650, 32
      %v920 = vpop.permute.xlu0 %919
      %921 = vrot.lane.b32.xlu0 %v653, 32
      %v922 = vpop.permute.xlu0 %921
      %923 = vrot.lane.b32.xlu0 %v656, 32
      %v924 = vpop.permute.xlu0 %923
      %925 = vrot.lane.b32.xlu0 %v659, 32
      %v926 = vpop.permute.xlu0 %925
      %927 = vrot.lane.b32.xlu0 %v662, 32
      %v928 = vpop.permute.xlu0 %927
      %929 = vrot.lane.b32.xlu0 %v781, 32
      %v930 = vpop.permute.xlu0 %929
      %931 = vrot.lane.b32.xlu0 %v900, 32
      %v932 = vpop.permute.xlu0 %931
      %vm933 = vcmask 31744
      %v935 = vsel %vm933, %v325, %v583
      %v937 = vsel %vm933, %v326, %v585
      %v939 = vsel %vm933, %v327, %v587
      %v941 = vsel %vm933, %v328, %v589
      %v943 = vsel %vm933, %v329, %v591
      %v945 = vsel %vm933, %v330, %v593
      %v947 = vsel %vm933, %v331, %v595
      %v949 = vsel %vm933, %v332, %v597
      %v951 = vsel %vm933, %v333, %v599
      %v953 = vsel %vm933, %v334, %v601
      %v955 = vsel %vm933, %v335, %v603
      %v957 = vsel %vm933, %v336, %v605
      %v959 = vsel %vm933, %v337, %v607
      %v961 = vsel %vm933, %v338, %v609
      %v963 = vsel %vm933, %v339, %v611
      %v965 = vsel %vm933, %v340, %v613
      %vm966 = vcmask 64512
      %v968 = vsel %vm966, %v935, %v664
      %v970 = vsel %vm966, %v937, %v666
      %v972 = vsel %vm966, %v939, %v668
      %v974 = vsel %vm966, %v941, %v670
      %v976 = vsel %vm966, %v943, %v672
      %v978 = vsel %vm966, %v945, %v674
      %v980 = vsel %vm966, %v947, %v676
      %v982 = vsel %vm966, %v949, %v678
      %v984 = vsel %vm966, %v951, %v680
      %v986 = vsel %vm966, %v953, %v682
      %v988 = vsel %vm966, %v955, %v684
      %v990 = vsel %vm966, %v957, %v686
      %v992 = vsel %vm966, %v959, %v688
      %v994 = vsel %vm966, %v961, %v690
      %v996 = vsel %vm966, %v963, %v692
      %v998 = vsel %vm966, %v965, %v694
      %vm999 = vcmask 97280
      %v1001 = vsel %vm999, %v968, %v701
      %v1003 = vsel %vm999, %v970, %v703
      %v1005 = vsel %vm999, %v972, %v705
      %v1007 = vsel %vm999, %v974, %v707
      %v1009 = vsel %vm999, %v976, %v709
      %v1011 = vsel %vm999, %v978, %v711
      %v1013 = vsel %vm999, %v980, %v713
      %v1015 = vsel %vm999, %v982, %v715
      %v1017 = vsel %vm999, %v984, %v717
      %v1019 = vsel %vm999, %v986, %v719
      %v1021 = vsel %vm999, %v988, %v721
      %v1023 = vsel %vm999, %v990, %v723
      %v1025 = vsel %vm999, %v992, %v725
      %v1027 = vsel %vm999, %v994, %v727
      %v1029 = vsel %vm999, %v996, %v729
      %v1031 = vsel %vm999, %v998, %v731
      %vm1032 = vcmask 130048
      %v1034 = vsel %vm1032, %v1001, %v748
      %v1036 = vsel %vm1032, %v1003, %v750
      %v1038 = vsel %vm1032, %v1005, %v752
      %v1040 = vsel %vm1032, %v1007, %v754
      %v1042 = vsel %vm1032, %v1009, %v756
      %v1044 = vsel %vm1032, %v1011, %v758
      %v1046 = vsel %vm1032, %v1013, %v760
      %v1048 = vsel %vm1032, %v1015, %v762
      %v1050 = vsel %vm1032, %v1017, %v764
      %v1052 = vsel %vm1032, %v1019, %v766
      %v1054 = vsel %vm1032, %v1021, %v768
      %v1056 = vsel %vm1032, %v1023, %v770
      %v1058 = vsel %vm1032, %v1025, %v772
      %v1060 = vsel %vm1032, %v1027, %v774
      %v1062 = vsel %vm1032, %v1029, %v776
      %v1064 = vsel %vm1032, %v1031, %v778
      %vm1065 = vcmask 162816
      %v1067 = vsel %vm1065, %v1034, %v783
      %v1069 = vsel %vm1065, %v1036, %v785
      %v1071 = vsel %vm1065, %v1038, %v787
      %v1073 = vsel %vm1065, %v1040, %v789
      %v1075 = vsel %vm1065, %v1042, %v791
      %v1077 = vsel %vm1065, %v1044, %v793
      %v1079 = vsel %vm1065, %v1046, %v795
      %v1081 = vsel %vm1065, %v1048, %v797
      %v1083 = vsel %vm1065, %v1050, %v799
      %v1085 = vsel %vm1065, %v1052, %v801
      %v1087 = vsel %vm1065, %v1054, %v803
      %v1089 = vsel %vm1065, %v1056, %v805
      %v1091 = vsel %vm1065, %v1058, %v807
      %v1093 = vsel %vm1065, %v1060, %v809
      %v1095 = vsel %vm1065, %v1062, %v811
      %v1097 = vsel %vm1065, %v1064, %v813
      %vm1098 = vcmask 195584
      %v1100 = vsel %vm1098, %v1067, %v820
      %v1102 = vsel %vm1098, %v1069, %v822
      %v1104 = vsel %vm1098, %v1071, %v824
      %v1106 = vsel %vm1098, %v1073, %v826
      %v1108 = vsel %vm1098, %v1075, %v828
      %v1110 = vsel %vm1098, %v1077, %v830
      %v1112 = vsel %vm1098, %v1079, %v832
      %v1114 = vsel %vm1098, %v1081, %v834
      %v1116 = vsel %vm1098, %v1083, %v836
      %v1118 = vsel %vm1098, %v1085, %v838
      %v1120 = vsel %vm1098, %v1087, %v840
      %v1122 = vsel %vm1098, %v1089, %v842
      %v1124 = vsel %vm1098, %v1091, %v844
      %v1126 = vsel %vm1098, %v1093, %v846
      %v1128 = vsel %vm1098, %v1095, %v848
      %v1130 = vsel %vm1098, %v1097, %v850
      %vm1131 = vcmask 228352
      %v1133 = vsel %vm1131, %v1100, %v867
      %v1135 = vsel %vm1131, %v1102, %v869
      %v1137 = vsel %vm1131, %v1104, %v871
      %v1139 = vsel %vm1131, %v1106, %v873
      %v1141 = vsel %vm1131, %v1108, %v875
      %v1143 = vsel %vm1131, %v1110, %v877
      %v1145 = vsel %vm1131, %v1112, %v879
      %v1147 = vsel %vm1131, %v1114, %v881
      %v1149 = vsel %vm1131, %v1116, %v883
      %v1151 = vsel %vm1131, %v1118, %v885
      %v1153 = vsel %vm1131, %v1120, %v887
      %v1155 = vsel %vm1131, %v1122, %v889
      %v1157 = vsel %vm1131, %v1124, %v891
      %v1159 = vsel %vm1131, %v1126, %v893
      %v1161 = vsel %vm1131, %v1128, %v895
      %v1163 = vsel %vm1131, %v1130, %v897
      %vm1164 = vcmask 261120
      %v1166 = vsel %vm1164, %v1133, %v902
      %v1168 = vsel %vm1164, %v1135, %v904
      %v1170 = vsel %vm1164, %v1137, %v906
      %v1172 = vsel %vm1164, %v1139, %v908
      %v1174 = vsel %vm1164, %v1141, %v910
      %v1176 = vsel %vm1164, %v1143, %v912
      %v1178 = vsel %vm1164, %v1145, %v914
      %v1180 = vsel %vm1164, %v1147, %v916
      %v1182 = vsel %vm1164, %v1149, %v918
      %v1184 = vsel %vm1164, %v1151, %v920
      %v1186 = vsel %vm1164, %v1153, %v922
      %v1188 = vsel %vm1164, %v1155, %v924
      %v1190 = vsel %vm1164, %v1157, %v926
      %v1192 = vsel %vm1164, %v1159, %v928
      %v1194 = vsel %vm1164, %v1161, %v930
      %v1196 = vsel %vm1164, %v1163, %v932
      %v1197 = vld [vmem:[%s1] sm:$0xf]
      %v1198 = vld [vmem:[%s1 + $0x4] sm:$0xf]
      %v1199 = vld [vmem:[%s1 + $0x8] sm:$0xf]
      %v1200 = vld [vmem:[%s1 + $0xc] sm:$0xf]
      %v1201 = vld [vmem:[%s1 + $0x10] sm:$0x3]
      %v1207 = vunpack.c.l.b16 %v1197
      %v1208 = vunpack.c.l.b16 %v1198
      %v1209 = vunpack.c.l.b16 %v1199
      %v1210 = vunpack.c.l.b16 %v1200
      %v1211 = vunpack.c.l.b16 %v1201
      %v1212 = vpack.c.b16 %v1208, %v1207
      %v1213 = vpack.c.b16 %v1210, %v1209
      %v1214 = vpack.c.b16 %v1211, %v1211
      %vm1217 = vcmask 293888
      %v1218 = vsel %vm1217, %v1166, 0
      %v1220 = vsel %vm1217, %v1168, 0
      %v1222 = vsel %vm1217, %v1170, 0
      %v1224 = vsel %vm1217, %v1172, 0
      %v1226 = vsel %vm1217, %v1174, 0
      %v1228 = vsel %vm1217, %v1176, 0
      %v1230 = vsel %vm1217, %v1178, 0
      %v1232 = vsel %vm1217, %v1180, 0
      %v1234 = vsel %vm1217, %v1182, 0
      %v1236 = vsel %vm1217, %v1184, 0
      %v1238 = vsel %vm1217, %v1186, 0
      %v1240 = vsel %vm1217, %v1188, 0
      %v1242 = vsel %vm1217, %v1190, 0
      %v1244 = vsel %vm1217, %v1192, 0
      %v1246 = vsel %vm1217, %v1194, 0
      %v1248 = vsel %vm1217, %v1196, 0
      %vm1250 = vcmask 1041408
      %v1252 = vsel %vm1250, %v1214, 0
      %1254 = vmatpush.bf16.msra.mxu0 0
      %1255 = vmatpush.bf16.msra.mxu0 0
      %1256 = vmatpush.bf16.msra.mxu0 0
      %1257 = vmatpush.bf16.msra.mxu0 0
      %1258 = vmatpush.bf16.msra.mxu0 0
      %1259 = vmatpush.bf16.msra.mxu0 %v1252
      %1260 = vmatpush.bf16.msra.mxu0 %v1213
      %1261 = vmatpush.bf16.msra.mxu0 %v1212
      %1262 = vmatmul.bf16.gmra.mxu0 %v1218
      %v1263 = vpop.f32.mrf.mxu0
      %v1264 = vadd.f32 0.0, %v1263
      %v1265 = vpop.f32.mrf.mxu0
      %v1266 = vadd.f32 0.0, %v1265
      %1267 = vmatmul.bf16.gmra.mxu0 %v1220
      %v1268 = vpop.f32.mrf.mxu0
      %v1269 = vadd.f32 0.0, %v1268
      %v1270 = vpop.f32.mrf.mxu0
      %v1271 = vadd.f32 0.0, %v1270
      %1272 = vmatmul.bf16.gmra.mxu0 %v1222
      %v1273 = vpop.f32.mrf.mxu0
      %v1274 = vadd.f32 0.0, %v1273
      %v1275 = vpop.f32.mrf.mxu0
      %v1276 = vadd.f32 0.0, %v1275
      %1277 = vmatmul.bf16.gmra.mxu0 %v1224
      %v1278 = vpop.f32.mrf.mxu0
      %v1279 = vadd.f32 0.0, %v1278
      %v1280 = vpop.f32.mrf.mxu0
      %v1281 = vadd.f32 0.0, %v1280
      %1282 = vmatmul.bf16.gmra.mxu0 %v1226
      %v1283 = vpop.f32.mrf.mxu0
      %v1284 = vadd.f32 0.0, %v1283
      %v1285 = vpop.f32.mrf.mxu0
      %v1286 = vadd.f32 0.0, %v1285
      %1287 = vmatmul.bf16.gmra.mxu0 %v1228
      %v1288 = vpop.f32.mrf.mxu0
      %v1289 = vadd.f32 0.0, %v1288
      %v1290 = vpop.f32.mrf.mxu0
      %v1291 = vadd.f32 0.0, %v1290
      %1292 = vmatmul.bf16.gmra.mxu0 %v1230
      %v1293 = vpop.f32.mrf.mxu0
      %v1294 = vadd.f32 0.0, %v1293
      %v1295 = vpop.f32.mrf.mxu0
      %v1296 = vadd.f32 0.0, %v1295
      %1297 = vmatmul.bf16.gmra.mxu0 %v1232
      %v1298 = vpop.f32.mrf.mxu0
      %v1299 = vadd.f32 0.0, %v1298
      %v1300 = vpop.f32.mrf.mxu0
      %v1301 = vadd.f32 0.0, %v1300
      %1302 = vmatmul.bf16.gmra.mxu0 %v1234
      %v1303 = vpop.f32.mrf.mxu0
      %v1304 = vadd.f32 0.0, %v1303
      %v1305 = vpop.f32.mrf.mxu0
      %v1306 = vadd.f32 0.0, %v1305
      %1307 = vmatmul.bf16.gmra.mxu0 %v1236
      %v1308 = vpop.f32.mrf.mxu0
      %v1309 = vadd.f32 0.0, %v1308
      %v1310 = vpop.f32.mrf.mxu0
      %v1311 = vadd.f32 0.0, %v1310
      %1312 = vmatmul.bf16.gmra.mxu0 %v1238
      %v1313 = vpop.f32.mrf.mxu0
      %v1314 = vadd.f32 0.0, %v1313
      %v1315 = vpop.f32.mrf.mxu0
      %v1316 = vadd.f32 0.0, %v1315
      %1317 = vmatmul.bf16.gmra.mxu0 %v1240
      %v1318 = vpop.f32.mrf.mxu0
      %v1319 = vadd.f32 0.0, %v1318
      %v1320 = vpop.f32.mrf.mxu0
      %v1321 = vadd.f32 0.0, %v1320
      %1322 = vmatmul.bf16.gmra.mxu0 %v1242
      %v1323 = vpop.f32.mrf.mxu0
      %v1324 = vadd.f32 0.0, %v1323
      %v1325 = vpop.f32.mrf.mxu0
      %v1326 = vadd.f32 0.0, %v1325
      %1327 = vmatmul.bf16.gmra.mxu0 %v1244
      %v1328 = vpop.f32.mrf.mxu0
      %v1329 = vadd.f32 0.0, %v1328
      %v1330 = vpop.f32.mrf.mxu0
      %v1331 = vadd.f32 0.0, %v1330
      %1332 = vmatmul.bf16.gmra.mxu0 %v1246
      %v1333 = vpop.f32.mrf.mxu0
      %v1334 = vadd.f32 0.0, %v1333
      %v1335 = vpop.f32.mrf.mxu0
      %v1336 = vadd.f32 0.0, %v1335
      %1337 = vmatmul.bf16.gmra.mxu0 %v1248
      %v1338 = vpop.f32.mrf.mxu0
      %v1339 = vadd.f32 0.0, %v1338
      %v1340 = vpop.f32.mrf.mxu0
      %v1341 = vadd.f32 0.0, %v1340
      %1342 = vdwg.mxu0
      %1343 = vxpose.xlu0.b32.start [1/16] %v1264, 128
      %1344 = vxpose.xlu0.b32.cont [2/16] %v1266, 128
      %1345 = vxpose.xlu0.b32.cont [3/16] %v1269, 128
      %1346 = vxpose.xlu0.b32.cont [4/16] %v1271, 128
      %1347 = vxpose.xlu0.b32.cont [5/16] %v1274, 128
      %1348 = vxpose.xlu0.b32.cont [6/16] %v1276, 128
      %1349 = vxpose.xlu0.b32.cont [7/16] %v1279, 128
      %1350 = vxpose.xlu0.b32.cont [8/16] %v1281, 128
      %1351 = vxpose.xlu0.b32.cont [9/16] %v1284, 128
      %1352 = vxpose.xlu0.b32.cont [10/16] %v1286, 128
      %1353 = vxpose.xlu0.b32.cont [11/16] %v1289, 128
      %1354 = vxpose.xlu0.b32.cont [12/16] %v1291, 128
      %1355 = vxpose.xlu0.b32.cont [13/16] %v1294, 128
      %1356 = vxpose.xlu0.b32.cont [14/16] %v1296, 128
      %1357 = vxpose.xlu0.b32.cont [15/16] %v1299, 128
      %1358 = vxpose.xlu0.b32.end [16/16] %v1301, 128
      %v1359 = vpop.trf.xlu0
      %v1360 = vpop.trf.xlu0
      %v1361 = vpop.trf.xlu0
      %v1362 = vpop.trf.xlu0
      %v1363 = vpop.trf.xlu0
      %v1364 = vpop.trf.xlu0
      %v1365 = vpop.trf.xlu0
      %v1366 = vpop.trf.xlu0
      %v1367 = vpop.trf.xlu0
      %v1368 = vpop.trf.xlu0
      %v1369 = vpop.trf.xlu0
      %v1370 = vpop.trf.xlu0
      %v1371 = vpop.trf.xlu0
      %v1372 = vpop.trf.xlu0
      %v1373 = vpop.trf.xlu0
      %v1374 = vpop.trf.xlu0
      %1375 = vxpose.xlu0.b32.start [1/16] %v1304, 128
      %1376 = vxpose.xlu0.b32.cont [2/16] %v1306, 128
      %1377 = vxpose.xlu0.b32.cont [3/16] %v1309, 128
      %1378 = vxpose.xlu0.b32.cont [4/16] %v1311, 128
      %1379 = vxpose.xlu0.b32.cont [5/16] %v1314, 128
      %1380 = vxpose.xlu0.b32.cont [6/16] %v1316, 128
      %1381 = vxpose.xlu0.b32.cont [7/16] %v1319, 128
      %1382 = vxpose.xlu0.b32.cont [8/16] %v1321, 128
      %1383 = vxpose.xlu0.b32.cont [9/16] %v1324, 128
      %1384 = vxpose.xlu0.b32.cont [10/16] %v1326, 128
      %1385 = vxpose.xlu0.b32.cont [11/16] %v1329, 128
      %1386 = vxpose.xlu0.b32.cont [12/16] %v1331, 128
      %1387 = vxpose.xlu0.b32.cont [13/16] %v1334, 128
      %1388 = vxpose.xlu0.b32.cont [14/16] %v1336, 128
      %1389 = vxpose.xlu0.b32.cont [15/16] %v1339, 128
      %1390 = vxpose.xlu0.b32.end [16/16] %v1341, 128
      %v1391 = vpop.trf.xlu0
      %v1392 = vpop.trf.xlu0
      %v1393 = vpop.trf.xlu0
      %v1394 = vpop.trf.xlu0
      %v1395 = vpop.trf.xlu0
      %v1396 = vpop.trf.xlu0
      %v1397 = vpop.trf.xlu0
      %v1398 = vpop.trf.xlu0
      %v1399 = vpop.trf.xlu0
      %v1400 = vpop.trf.xlu0
      %v1401 = vpop.trf.xlu0
      %v1402 = vpop.trf.xlu0
      %v1403 = vpop.trf.xlu0
      %v1404 = vpop.trf.xlu0
      %v1405 = vpop.trf.xlu0
      %v1406 = vpop.trf.xlu0
      %v1407 = vpack.c.bf16 %v1391, %v1359
      %1408 = vst [vmem:[%s200] sm:$0xff] %v1407
      %v1409 = vsel %vm966, %v1264, 0.0
      %v1410 = vsel %vm966, %v1266, 0.0
      %v1411 = vadd.f32 %v1409, %v1410
      %v1412 = vsel %vm966, %v1269, 0.0
      %v1413 = vadd.f32 %v1411, %v1412
      %v1414 = vsel %vm966, %v1271, 0.0
      %v1415 = vadd.f32 %v1413, %v1414
      %v1416 = vsel %vm966, %v1274, 0.0
      %v1417 = vadd.f32 %v1415, %v1416
      %v1418 = vsel %vm966, %v1276, 0.0
      %v1419 = vadd.f32 %v1417, %v1418
      %v1420 = vsel %vm966, %v1279, 0.0
      %v1421 = vadd.f32 %v1419, %v1420
      %v1422 = vsel %vm966, %v1281, 0.0
      %v1423 = vadd.f32 %v1421, %v1422
      %v1424 = vsel %vm966, %v1284, 0.0
      %v1425 = vadd.f32 %v1423, %v1424
      %v1426 = vsel %vm966, %v1286, 0.0
      %v1427 = vadd.f32 %v1425, %v1426
      %v1428 = vsel %vm966, %v1289, 0.0
      %v1429 = vadd.f32 %v1427, %v1428
      %v1430 = vsel %vm966, %v1291, 0.0
      %v1431 = vadd.f32 %v1429, %v1430
      %v1432 = vsel %vm966, %v1294, 0.0
      %v1433 = vadd.f32 %v1431, %v1432
      %v1434 = vsel %vm966, %v1296, 0.0
      %v1435 = vadd.f32 %v1433, %v1434
      %v1436 = vsel %vm966, %v1299, 0.0
      %v1437 = vadd.f32 %v1435, %v1436
      %v1438 = vsel %vm966, %v1301, 0.0
      %v1439 = vadd.f32 %v1437, %v1438
      %v1440 = vsel %vm966, %v1304, 0.0
      %v1441 = vadd.f32 %v1439, %v1440
      %v1442 = vsel %vm966, %v1306, 0.0
      %v1443 = vadd.f32 %v1441, %v1442
      %v1444 = vsel %vm966, %v1309, 0.0
      %v1445 = vadd.f32 %v1443, %v1444
      %v1446 = vsel %vm966, %v1311, 0.0
      %v1447 = vadd.f32 %v1445, %v1446
      %v1448 = vsel %vm966, %v1314, 0.0
      %v1449 = vadd.f32 %v1447, %v1448
      %v1450 = vsel %vm966, %v1316, 0.0
      %v1451 = vadd.f32 %v1449, %v1450
      %v1452 = vsel %vm966, %v1319, 0.0
      %v1453 = vadd.f32 %v1451, %v1452
      %v1454 = vsel %vm966, %v1321, 0.0
      %v1455 = vadd.f32 %v1453, %v1454
      %v1456 = vsel %vm966, %v1324, 0.0
      %v1457 = vadd.f32 %v1455, %v1456
      %v1458 = vsel %vm966, %v1326, 0.0
      %v1459 = vadd.f32 %v1457, %v1458
      %v1460 = vsel %vm966, %v1329, 0.0
      %v1461 = vadd.f32 %v1459, %v1460
      %v1462 = vsel %vm966, %v1331, 0.0
      %v1463 = vadd.f32 %v1461, %v1462
      %v1464 = vsel %vm966, %v1334, 0.0
      %v1465 = vadd.f32 %v1463, %v1464
      %v1466 = vsel %vm966, %v1336, 0.0
      %v1467 = vadd.f32 %v1465, %v1466
      %v1468 = vsel %vm966, %v1339, 0.0
      %v1469 = vadd.f32 %v1467, %v1468
      %v1470 = vsel %vm966, %v1341, 0.0
      %v1471 = vadd.f32 %v1469, %v1470
      %v1472 = vrot.slane %v1471, 4
      %v1473 = vadd.f32 %v1471, %v1472
      %v1474 = vrot.slane %v1473, 2
      %v1475 = vadd.f32 %v1473, %v1474
      %v1476 = vrot.slane %v1475, 1
      %v1477 = vadd.f32 %v1475, %v1476
      %v1478 = vmul.f32 %v1264, %v1264
      %v1479 = vmul.f32 %v1266, %v1266
      %v1480 = vmul.f32 %v1269, %v1269
      %v1481 = vmul.f32 %v1271, %v1271
      %v1482 = vmul.f32 %v1274, %v1274
      %v1483 = vmul.f32 %v1276, %v1276
      %v1484 = vmul.f32 %v1279, %v1279
      %v1485 = vmul.f32 %v1281, %v1281
      %v1486 = vmul.f32 %v1284, %v1284
      %v1487 = vmul.f32 %v1286, %v1286
      %v1488 = vmul.f32 %v1289, %v1289
      %v1489 = vmul.f32 %v1291, %v1291
      %v1490 = vmul.f32 %v1294, %v1294
      %v1491 = vmul.f32 %v1296, %v1296
      %v1492 = vmul.f32 %v1299, %v1299
      %v1493 = vmul.f32 %v1301, %v1301
      %v1494 = vmul.f32 %v1304, %v1304
      %v1495 = vmul.f32 %v1306, %v1306
      %v1496 = vmul.f32 %v1309, %v1309
      %v1497 = vmul.f32 %v1311, %v1311
      %v1498 = vmul.f32 %v1314, %v1314
      %v1499 = vmul.f32 %v1316, %v1316
      %v1500 = vmul.f32 %v1319, %v1319
      %v1501 = vmul.f32 %v1321, %v1321
      %v1502 = vmul.f32 %v1324, %v1324
      %v1503 = vmul.f32 %v1326, %v1326
      %v1504 = vmul.f32 %v1329, %v1329
      %v1505 = vmul.f32 %v1331, %v1331
      %v1506 = vmul.f32 %v1334, %v1334
      %v1507 = vmul.f32 %v1336, %v1336
      %v1508 = vmul.f32 %v1339, %v1339
      %v1509 = vmul.f32 %v1341, %v1341
      %v1510 = vsel %vm966, %v1478, 0.0
      %v1511 = vsel %vm966, %v1479, 0.0
      %v1512 = vadd.f32 %v1510, %v1511
      %v1513 = vsel %vm966, %v1480, 0.0
      %v1514 = vadd.f32 %v1512, %v1513
      %v1515 = vsel %vm966, %v1481, 0.0
      %v1516 = vadd.f32 %v1514, %v1515
      %v1517 = vsel %vm966, %v1482, 0.0
      %v1518 = vadd.f32 %v1516, %v1517
      %v1519 = vsel %vm966, %v1483, 0.0
      %v1520 = vadd.f32 %v1518, %v1519
      %v1521 = vsel %vm966, %v1484, 0.0
      %v1522 = vadd.f32 %v1520, %v1521
      %v1523 = vsel %vm966, %v1485, 0.0
      %v1524 = vadd.f32 %v1522, %v1523
      %v1525 = vsel %vm966, %v1486, 0.0
      %v1526 = vadd.f32 %v1524, %v1525
      %v1527 = vsel %vm966, %v1487, 0.0
      %v1528 = vadd.f32 %v1526, %v1527
      %v1529 = vsel %vm966, %v1488, 0.0
      %v1530 = vadd.f32 %v1528, %v1529
      %v1531 = vsel %vm966, %v1489, 0.0
      %v1532 = vadd.f32 %v1530, %v1531
      %v1533 = vsel %vm966, %v1490, 0.0
      %v1534 = vadd.f32 %v1532, %v1533
      %v1535 = vsel %vm966, %v1491, 0.0
      %v1536 = vadd.f32 %v1534, %v1535
      %v1537 = vsel %vm966, %v1492, 0.0
      %v1538 = vadd.f32 %v1536, %v1537
      %v1539 = vsel %vm966, %v1493, 0.0
      %v1540 = vadd.f32 %v1538, %v1539
      %v1541 = vsel %vm966, %v1494, 0.0
      %v1542 = vadd.f32 %v1540, %v1541
      %v1543 = vsel %vm966, %v1495, 0.0
      %v1544 = vadd.f32 %v1542, %v1543
      %v1545 = vsel %vm966, %v1496, 0.0
      %v1546 = vadd.f32 %v1544, %v1545
      %v1547 = vsel %vm966, %v1497, 0.0
      %v1548 = vadd.f32 %v1546, %v1547
      %v1549 = vsel %vm966, %v1498, 0.0
      %v1550 = vadd.f32 %v1548, %v1549
      %v1551 = vsel %vm966, %v1499, 0.0
      %v1552 = vadd.f32 %v1550, %v1551
      %v1553 = vsel %vm966, %v1500, 0.0
      %v1554 = vadd.f32 %v1552, %v1553
      %v1555 = vsel %vm966, %v1501, 0.0
      %v1556 = vadd.f32 %v1554, %v1555
      %v1557 = vsel %vm966, %v1502, 0.0
      %v1558 = vadd.f32 %v1556, %v1557
      %v1559 = vsel %vm966, %v1503, 0.0
      %v1560 = vadd.f32 %v1558, %v1559
      %v1561 = vsel %vm966, %v1504, 0.0
      %v1562 = vadd.f32 %v1560, %v1561
      %v1563 = vsel %vm966, %v1505, 0.0
      %v1564 = vadd.f32 %v1562, %v1563
      %v1565 = vsel %vm966, %v1506, 0.0
      %v1566 = vadd.f32 %v1564, %v1565
      %v1567 = vsel %vm966, %v1507, 0.0
      %v1568 = vadd.f32 %v1566, %v1567
      %v1569 = vsel %vm966, %v1508, 0.0
      %v1570 = vadd.f32 %v1568, %v1569
      %v1571 = vsel %vm966, %v1509, 0.0
      %v1572 = vadd.f32 %v1570, %v1571
      %v1573 = vrot.slane %v1572, 4
      %v1574 = vadd.f32 %v1572, %v1573
      %v1575 = vrot.slane %v1574, 2
      %v1576 = vadd.f32 %v1574, %v1575
      %v1577 = vrot.slane %v1576, 1
      %v1578 = vadd.f32 %v1576, %v1577
      %vm1579 = vcmask 1040384
      %v1580 = vsel %vm1579, %v1477, %v1578
      %p1581 = scmp.eq.s32.totalorder %s20, 0
      // Predicated region
      $region29: #{conv_bn_lrelu.2} parent=27 // pred_check
        %p1582 = pneg %p1581
      $region30: #{conv_bn_lrelu.2} parent=27 // pred_check_branch
        %1584 = sbr.rel (%p1582) target = $region32
      $region31: #{conv_bn_lrelu.2} parent=27 // pred_region
        %vm1585 = vcmask 58368
        %1586 = vst.msk [vmem:[%s205] sm:$0x3] %vm1585, 0.0
      $region32: #{conv_bn_lrelu.2} parent=27 // pred_fallthru
        _
      %v1587 = vld [vmem:[%s205] sm:$0x3]
      %v1588 = vadd.f32 %v1587, %v1580
      %vm1589 = vcmask 58368
      %1590 = vst.msk [vmem:[%s205] sm:$0x3] %vm1589, %v1588
      %s1591 = sadd.s32 %s19, %s20
      %p1592 = scmp.lt.s32.totalorder %s1591, 1
      %s1593 = scalar_select %p1592, %s1591, 1
      %s1594 = smul.addr %s1593, 2
      %s1595 = smul.addr %s1594, 4
      %s1596 = scalar_lea.vmem %s2, %s1595
      %p1597 = scmp.lt.s32.totalorder %s19, 1
      %s1598 = scalar_select %p1597, %s19, 1
      %s1599 = smul.addr %s1598, 2
      %s1600 = scalar_lea.vmem %s3, %s1599
      // Predicated region
      $region33: #{conv_bn_lrelu.2} parent=27 // pred_check
        %p1601 = pneg %p96
      $region34: #{conv_bn_lrelu.2} parent=27 // pred_check_branch
        %1603 = sbr.rel (%p1601) target = $region36
      $region35: #{conv_bn_lrelu.2} parent=27 // pred_region
        %s1604 = sadd.s32 %s19, %s20
      $region36: #{conv_bn_lrelu.2} parent=27 // pred_fallthru
        _
      // Predicated region
      $region37: #{conv_bn_lrelu.2} parent=27 // pred_check
        %p1605 = pneg %p122
      $region38: #{conv_bn_lrelu.2} parent=27 // pred_check_branch
        %1607 = sbr.rel (%p1605) target = $region40
      $region39: #{conv_bn_lrelu.2} parent=27 // pred_region
        _
      $region40: #{conv_bn_lrelu.2} parent=27 // pred_fallthru
        _
    $region28: #{conv_bn_lrelu.2} parent=5 // pred_fallthru
      _
    %p1608 = scmp.le.s32.totalorder 2, %s10
    // Predicated region
    $region41: #{conv_bn_lrelu.2} parent=5 // pred_check
      %p1609 = pneg %p1608
    $region42: #{conv_bn_lrelu.2} parent=5 // pred_check_branch
      %1611 = sbr.rel (%p1609) target = $region44
    $region43: #{conv_bn_lrelu.2} parent=5 // pred_region
      %s1612 = ssub.s32 %s10, 2
      // Predicated region
      $region45: #{conv_bn_lrelu.2} parent=43 // pred_check
        %p1613 = pneg %p102
      $region46: #{conv_bn_lrelu.2} parent=43 // pred_check_branch
        %1615 = sbr.rel (%p1613) target = $region48
      $region47: #{conv_bn_lrelu.2} parent=43 // pred_region
        %s1616 = sadd.s32 %s21, %s22
        %p1617 = scmp.lt.s32.totalorder %s1616, 1
        %s1618 = scalar_select %p1617, %s1616, 1
        %s1619 = smul.addr %s1618, 2
        %s1620 = smul.addr %s1619, 4
        %s1621 = scalar_lea.vmem %s2, %s1620
      $region48: #{conv_bn_lrelu.2} parent=43 // pred_fallthru
        _
      // Predicated region
      $region49: #{conv_bn_lrelu.2} parent=43 // pred_check
        %p1622 = pneg %p128
      $region50: #{conv_bn_lrelu.2} parent=43 // pred_check_branch
        %1624 = sbr.rel (%p1622) target = $region52
      $region51: #{conv_bn_lrelu.2} parent=43 // pred_region
        %p1625 = scmp.lt.s32.totalorder %s21, 1
        %s1626 = scalar_select %p1625, %s21, 1
        %s1627 = smul.addr %s1626, 2
        %s1628 = scalar_lea.vmem %s3, %s1627
      $region52: #{conv_bn_lrelu.2} parent=43 // pred_fallthru
        _
    $region44: #{conv_bn_lrelu.2} parent=5 // pred_fallthru
      _
  $region6: #{conv_bn_lrelu.2} parent=0 // loop_footer
    %s14 = sadd.s32 1, %s10
  $region7: #{conv_bn_lrelu.2} parent=0 // loop_footer_branch
    %9 = sbr.rel target = $region3
  $region8: #{conv_bn_lrelu.2} parent=0 // loop_exit
    _

</llo_original>
